<compile_context>
chip_gen: v7x
topology: tpu7x:2x2x1
jax: 0.10.0
libtpu: 0.0.40
codegen_flags: <defaults>
</compile_context>

<pallas_src>
import functools

import jax
import jax.numpy as jnp
from jax.experimental import pallas as pl
from jax.experimental.pallas import tpu as pltpu


def _discriminator_kernel(x_ref, w1_ref, b1_ref, w2_ref, b2_ref,
                          w3_ref, b3_ref, o_ref):
    # x tile arrives as f32 (no wrapper-side cast/pad); cast to bf16 in-kernel.
    x = x_ref[...].astype(jnp.bfloat16)

    # Layer 1: Linear(D, 512) on the bf16 MXU with f32 accumulation,
    # bias + ReLU epilogue in bf16 (bf16-native VALUs on v6e/v7x).
    h1 = jnp.dot(x, w1_ref[...], preferred_element_type=jnp.float32)
    h1 = jnp.maximum(h1.astype(jnp.bfloat16) + b1_ref[...], 0.0)

    # Layer 2: Linear(512, 128) + ReLU (f32 epilogue, feeds the VPU head).
    h2 = jnp.dot(h1, w2_ref[...], preferred_element_type=jnp.float32)
    h2 = jnp.maximum(h2 + b2_ref[...], 0.0)

    # Layer 3: Linear(128, 1) + Sigmoid on the VPU/XLU/EUP (an N=1 MXU matmul
    # would waste the MXU): broadcast-multiply by the weight row + lane reduce,
    # exp and approximate reciprocal go to the otherwise idle EUP slot.
    z = jnp.sum(h2 * w3_ref[...], axis=-1) + b3_ref[0]          # (block_b,)
    denom = 1.0 + jnp.exp(-z)
    if hasattr(pl, "reciprocal"):
        sig = pl.reciprocal(denom, approx=True)
    else:
        sig = 1.0 / denom

    # Lane-dense store: batch occupies the lane axis of the (1, block_b) block.
    o_ref[...] = sig.reshape(1, -1).astype(o_ref.dtype)


@functools.partial(jax.jit,
                   static_argnames=("block_b", "vmem_limit", "single_buffer"))
def _forward(x, w1, b1, w2, b2, w3, b3, *, block_b, vmem_limit, single_buffer):
    B, D = x.shape
    n_blocks = pl.cdiv(B, block_b)
    b_pad = n_blocks * block_b

    buffered = getattr(pl, "Buffered", None)
    if single_buffer and buffered is not None:
        # Grid-invariant operands: a single VMEM buffer (double-buffering them
        # is pure VMEM waste since their block index never changes).
        def rep(shape):
            return pl.BlockSpec(shape, lambda i: (0, 0),
                                pipeline_mode=buffered(1))
    else:
        def rep(shape):
            return pl.BlockSpec(shape, lambda i: (0, 0))

    out = pl.pallas_call(
        _discriminator_kernel,
        out_shape=jax.ShapeDtypeStruct((1, b_pad), jnp.float32),
        grid_spec=pltpu.PrefetchScalarGridSpec(
            num_scalar_prefetch=0,
            grid=(n_blocks,),
            in_specs=[
                pl.BlockSpec((block_b, D), lambda i: (i, 0)),   # x batch tile
                rep(w1.shape), rep(b1.shape),
                rep(w2.shape), rep(b2.shape),
                rep(w3.shape),
                pl.BlockSpec(memory_space=pltpu.MemorySpace.SMEM),  # b3 scalar
            ],
            out_specs=pl.BlockSpec((1, block_b), lambda i: (0, i)),
        ),
        compiler_params=pltpu.CompilerParams(
            dimension_semantics=("parallel",),
            vmem_limit_bytes=vmem_limit,
        ),
    )(x, w1, b1, w2, b2, w3, b3)

    # Padded tail columns hold unspecified values (partial edge block); rows
    # are independent, so slicing keeps only the valid batch entries.
    return out[0, :B].reshape(B, 1)


def _round_up(n, m):
    return ((n + m - 1) // m) * m


def _default_config():
    """(vmem_limit_bytes, default block_b) per TPU generation."""
    vmem_bytes = 64 * 1024 * 1024            # conservative (v7x per-TensorCore)
    try:
        vmem_bytes = pltpu.get_tpu_info().vmem_capacity_bytes
    except Exception:
        pass
    if vmem_bytes >= 128 * 1024 * 1024:      # v5e / v6e: plenty of VMEM
        return 96 * 1024 * 1024, 1024
    return 48 * 1024 * 1024, 512             # v7x: 64 MiB/core, leave headroom


def _pick_block_b(batch, block_b, input_dim, vmem_limit):
    # Small batches: don't pad a batch of 8 up to 512 rows of wasted work.
    bb = min(block_b, _round_up(batch, 128))
    # Prefer >=2 grid steps when the batch allows it (v7x has 2 TensorCores).
    if batch > 128 and pl.cdiv(batch, bb) < 2:
        bb = max(128, _round_up(pl.cdiv(batch, 2), 128))

    # Shrink the tile if the f32 x tile (double-buffered) + weights +
    # intermediates would not fit comfortably in the VMEM budget (large D).
    def vmem_estimate(b):
        x_bytes = 2 * b * input_dim * 4                    # f32 x, double buffer
        w_bytes = 2 * (input_dim * 512 + 512 * 128) * 2    # bf16 weights (worst)
        act_bytes = b * (512 * 4 + 512 * 2 + 128 * 4 + 16)
        return x_bytes + w_bytes + act_bytes

    while bb > 128 and vmem_estimate(bb) > int(0.7 * vmem_limit):
        bb = max(128, _round_up(bb // 2, 128))
    return bb


def discriminator_forward(x, prepared_params, block_b=None):
    """x: (B, input_dim) float32 -> (B, 1) float32 sigmoid probabilities."""
    batch, input_dim = x.shape
    vmem_limit, default_bb = _default_config()
    bb = default_bb if block_b is None else block_b
    if bb % 128 != 0:
        raise ValueError("block_b must be a multiple of 128")
    bb = _pick_block_b(batch, bb, input_dim, vmem_limit)

    args = (x,) + tuple(prepared_params)
    try:
        out = _forward(*args, block_b=bb, vmem_limit=vmem_limit,
                       single_buffer=True)
        return jax.block_until_ready(out)
    except Exception:
        # Fallback if this Pallas build rejects pipeline_mode=pl.Buffered(1).
        out = _forward(*args, block_b=bb, vmem_limit=vmem_limit,
                       single_buffer=False)
        return jax.block_until_ready(out)


def init_params(key, input_dim):
    """Deterministic synthetic init mirroring nn.Linear's uniform scheme (f32)."""
    def linear_init(k, fan_in, fan_out):
        kw, kb = jax.random.split(k)
        bound = 1.0 / jnp.sqrt(fan_in)
        # Stored as (in, out) so the kernel computes x @ W.
        w = jax.random.uniform(kw, (fan_in, fan_out), jnp.float32,
                               minval=-bound, maxval=bound)
        b = jax.random.uniform(kb, (fan_out,), jnp.float32,
                               minval=-bound, maxval=bound)
        return w, b

    k1, k2, k3 = jax.random.split(key, 3)
    w1, b1 = linear_init(k1, input_dim, 512)
    w2, b2 = linear_init(k2, 512, 128)
    w3, b3 = linear_init(k3, 128, 1)
    return (w1, b1, w2, b2, w3, b3)


def prepare_params(params):
    """One-time (outside the jitted forward) dtype/layout prep of the weights."""
    w1, b1, w2, b2, w3, b3 = params
    return (w1.astype(jnp.bfloat16),                    # (D, 512)   bf16 MXU
            b1.reshape(1, -1).astype(jnp.bfloat16),     # (1, 512)   bf16 epilogue
            w2.astype(jnp.bfloat16),                    # (512, 128) bf16 MXU
            b2.reshape(1, -1).astype(jnp.float32),      # (1, 128)
            w3.reshape(1, -1).astype(jnp.float32),      # (1, 128)   VPU head
            b3.reshape(-1).astype(jnp.float32))         # (1,)       SMEM scalar


def reference_forward(x, params):
    w1, b1, w2, b2, w3, b3 = params
    h1 = jax.nn.relu(x @ w1 + b1)
    h2 = jax.nn.relu(h1 @ w2 + b2)
    return jax.nn.sigmoid(h2 @ w3 + b3)


if __name__ == "__main__":
    key = jax.random.PRNGKey(0)
    k_x, k_p = jax.random.split(key)

    batch, input_dim = 8, 32
    x = jax.random.normal(k_x, (batch, input_dim), jnp.float32)
    params = init_params(k_p, input_dim)
    prepared = prepare_params(params)    # one-time bf16 cast of the weights

    out = discriminator_forward(x, prepared)
    out = jax.block_until_ready(out)

    ref = reference_forward(x, params)
    assert out.shape == (batch, 1)
    # bf16 matmuls with f32 accumulation: loosened tolerance vs f32 reference.
    assert jnp.allclose(out, ref, atol=2e-2, rtol=2e-2), (
        f"max abs err {jnp.max(jnp.abs(out - ref))}")

    print("KERNEL_OK")
</pallas_src>

<mosaic_0001>
module attributes {stable_mosaic.version = 11 : i64} {
  func.func @_discriminator_kernel(%arg0: i32, %arg1: memref<128x32xf32, #tpu.memory_space<vmem>>, %arg2: memref<32x512xbf16, #tpu.memory_space<vmem>>, %arg3: memref<1x512xbf16, #tpu.memory_space<vmem>>, %arg4: memref<512x128xbf16, #tpu.memory_space<vmem>>, %arg5: memref<1x128xf32, #tpu.memory_space<vmem>>, %arg6: memref<1x128xf32, #tpu.memory_space<vmem>>, %arg7: memref<1xf32, #tpu.memory_space<smem>>, %arg8: memref<1x128xf32, #tpu.memory_space<vmem>>) attributes {dimension_semantics = [#tpu.dimension_semantics<parallel>], iteration_bounds = array<i64: 1>, scalar_prefetch = 0 : i64, scratch_operands = 0 : i64, tpu.core_type = #tpu.core_type<tc>, window_params = [{transform_indices = @transform_0, window_bounds = array<i64: 128, 32>}, {pipeline_mode = #tpu.pipeline_mode<synchronous>, transform_indices = @transform_1, window_bounds = array<i64: 32, 512>}, {pipeline_mode = #tpu.pipeline_mode<synchronous>, transform_indices = @transform_2, window_bounds = array<i64: 1, 512>}, {pipeline_mode = #tpu.pipeline_mode<synchronous>, transform_indices = @transform_3, window_bounds = array<i64: 512, 128>}, {pipeline_mode = #tpu.pipeline_mode<synchronous>, transform_indices = @transform_4, window_bounds = array<i64: 1, 128>}, {pipeline_mode = #tpu.pipeline_mode<synchronous>, transform_indices = @transform_5, window_bounds = array<i64: 1, 128>}, {transform_indices = @transform_6, window_bounds = array<i64: 1>}, {transform_indices = @transform_7, window_bounds = array<i64: 1, 128>}]} {
    %c0 = arith.constant 0 : index
    %c0_0 = arith.constant 0 : index
    %0 = vector.load %arg1[%c0, %c0_0] : memref<128x32xf32, #tpu.memory_space<vmem>>, vector<128x32xf32>
    %1 = arith.truncf %0 : vector<128x32xf32> to vector<128x32xbf16>
    %c0_1 = arith.constant 0 : index
    %c0_2 = arith.constant 0 : index
    %2 = vector.load %arg2[%c0_1, %c0_2] : memref<32x512xbf16, #tpu.memory_space<vmem>>, vector<32x512xbf16>
    %cst = arith.constant dense<0.000000e+00> : vector<128x512xf32>
    %3 = tpu.matmul %1, %2, %cst {dimension_numbers = #tpu.dot_dimension_numbers<[1], [0], [0], [1], [0, 0, 1, 1], [], []>} : vector<128x32xbf16>, vector<32x512xbf16>, vector<128x512xf32> -> vector<128x512xf32>
    %4 = arith.truncf %3 : vector<128x512xf32> to vector<128x512xbf16>
    %c0_3 = arith.constant 0 : index
    %c0_4 = arith.constant 0 : index
    %5 = vector.load %arg3[%c0_3, %c0_4] : memref<1x512xbf16, #tpu.memory_space<vmem>>, vector<1x512xbf16>
    %6 = vector.broadcast %5 : vector<1x512xbf16> to vector<128x512xbf16>
    %7 = arith.addf %4, %6 : vector<128x512xbf16>
    %cst_5 = arith.constant 0.000000e+00 : bf16
    %8 = vector.broadcast %cst_5 : bf16 to vector<128x512xbf16>
    %9 = arith.maximumf %7, %8 : vector<128x512xbf16>
    %c0_6 = arith.constant 0 : index
    %c0_7 = arith.constant 0 : index
    %10 = vector.load %arg4[%c0_6, %c0_7] : memref<512x128xbf16, #tpu.memory_space<vmem>>, vector<512x128xbf16>
    %cst_8 = arith.constant dense<0.000000e+00> : vector<128x128xf32>
    %11 = tpu.matmul %9, %10, %cst_8 {dimension_numbers = #tpu.dot_dimension_numbers<[1], [0], [0], [1], [0, 0, 1, 1], [], []>} : vector<128x512xbf16>, vector<512x128xbf16>, vector<128x128xf32> -> vector<128x128xf32>
    %c0_9 = arith.constant 0 : index
    %c0_10 = arith.constant 0 : index
    %12 = vector.load %arg5[%c0_9, %c0_10] : memref<1x128xf32, #tpu.memory_space<vmem>>, vector<1x128xf32>
    %13 = vector.broadcast %12 : vector<1x128xf32> to vector<128x128xf32>
    %14 = arith.addf %11, %13 : vector<128x128xf32>
    %cst_11 = arith.constant 0.000000e+00 : f32
    %15 = vector.broadcast %cst_11 : f32 to vector<128x128xf32>
    %16 = arith.maximumf %14, %15 : vector<128x128xf32>
    %c0_12 = arith.constant 0 : index
    %c0_13 = arith.constant 0 : index
    %17 = vector.load %arg6[%c0_12, %c0_13] : memref<1x128xf32, #tpu.memory_space<vmem>>, vector<1x128xf32>
    %18 = vector.broadcast %17 : vector<1x128xf32> to vector<128x128xf32>
    %19 = arith.mulf %16, %18 : vector<128x128xf32>
    %cst_14 = arith.constant dense<0.000000e+00> : vector<128xf32>
    %20 = vector.multi_reduction <add>, %19, %cst_14 [1] : vector<128x128xf32> to vector<128xf32>
    %c0_15 = arith.constant 0 : index
    %21 = memref.load %arg7[%c0_15] : memref<1xf32, #tpu.memory_space<smem>>
    %22 = vector.broadcast %21 : f32 to vector<128xf32>
    %23 = arith.addf %20, %22 : vector<128xf32>
    %cst_16 = arith.constant 0.000000e+00 : f32
    %24 = vector.broadcast %cst_16 : f32 to vector<128xf32>
    %25 = arith.subf %24, %23 : vector<128xf32>
    %26 = math.exp %25 : vector<128xf32>
    %cst_17 = arith.constant 1.000000e+00 : f32
    %27 = vector.broadcast %cst_17 : f32 to vector<128xf32>
    %28 = arith.addf %27, %26 : vector<128xf32>
    %29 = tpu.reciprocal %28 {approx = true} : vector<128xf32> -> vector<128xf32>
    %30 = vector.shape_cast %29 : vector<128xf32> to vector<1x128xf32>
    %c0_18 = arith.constant 0 : index
    %c0_19 = arith.constant 0 : index
    %31 = vector.load %arg8[%c0_18, %c0_19] : memref<1x128xf32, #tpu.memory_space<vmem>>, vector<1x128xf32>
    tpu.vector_store %arg8[%c0_18, %c0_19], %30 {strides = array<i32>} : memref<1x128xf32, #tpu.memory_space<vmem>>, vector<1x128xf32>,
    return
  }
  func.func @transform_0(%arg0: i32) -> (i32, i32) {
    %c0_i32 = arith.constant 0 : i32
    %c0_i32_0 = arith.constant 0 : i32
    return %arg0, %c0_i32 : i32, i32
  }
  func.func @transform_1(%arg0: i32) -> (i32, i32) {
    %c0_i32 = arith.constant 0 : i32
    %c0_i32_0 = arith.constant 0 : i32
    %c0_i32_1 = arith.constant 0 : i32
    return %c0_i32, %c0_i32_0 : i32, i32
  }
  func.func @transform_2(%arg0: i32) -> (i32, i32) {
    %c0_i32 = arith.constant 0 : i32
    %c0_i32_0 = arith.constant 0 : i32
    %c0_i32_1 = arith.constant 0 : i32
    return %c0_i32, %c0_i32_0 : i32, i32
  }
  func.func @transform_3(%arg0: i32) -> (i32, i32) {
    %c0_i32 = arith.constant 0 : i32
    %c0_i32_0 = arith.constant 0 : i32
    %c0_i32_1 = arith.constant 0 : i32
    return %c0_i32, %c0_i32_0 : i32, i32
  }
  func.func @transform_4(%arg0: i32) -> (i32, i32) {
    %c0_i32 = arith.constant 0 : i32
    %c0_i32_0 = arith.constant 0 : i32
    %c0_i32_1 = arith.constant 0 : i32
    return %c0_i32, %c0_i32_0 : i32, i32
  }
  func.func @transform_5(%arg0: i32) -> (i32, i32) {
    %c0_i32 = arith.constant 0 : i32
    %c0_i32_0 = arith.constant 0 : i32
    %c0_i32_1 = arith.constant 0 : i32
    return %c0_i32, %c0_i32_0 : i32, i32
  }
  func.func @transform_6(%arg0: i32) -> i32 {
    %c0_i32 = arith.constant 0 : i32
    %c0_i32_0 = arith.constant 0 : i32
    return %c0_i32 : i32
  }
  func.func @transform_7(%arg0: i32) -> (i32, i32) {
    %c0_i32 = arith.constant 0 : i32
    %c0_i32_0 = arith.constant 0 : i32
    return %c0_i32, %arg0 : i32, i32
  }
}

module attributes {stable_mosaic.version = 11 : i64} {
  func.func @_discriminator_kernel(%arg0: i32, %arg1: memref<128x32xf32, #tpu.memory_space<vmem>>, %arg2: memref<32x512xbf16, #tpu.memory_space<vmem>>, %arg3: memref<1x512xbf16, #tpu.memory_space<vmem>>, %arg4: memref<512x128xbf16, #tpu.memory_space<vmem>>, %arg5: memref<1x128xf32, #tpu.memory_space<vmem>>, %arg6: memref<1x128xf32, #tpu.memory_space<vmem>>, %arg7: memref<1xf32, #tpu.memory_space<smem>>, %arg8: memref<1x128xf32, #tpu.memory_space<vmem>>) attributes {dimension_semantics = [#tpu.dimension_semantics<parallel>], iteration_bounds = array<i64: 1>, scalar_prefetch = 0 : i64, scratch_operands = 0 : i64, tpu.core_type = #tpu.core_type<tc>, window_params = [{transform_indices = @transform_0, window_bounds = array<i64: 128, 32>}, {pipeline_mode = #tpu.pipeline_mode<synchronous>, transform_indices = @transform_1, window_bounds = array<i64: 32, 512>}, {pipeline_mode = #tpu.pipeline_mode<synchronous>, transform_indices = @transform_2, window_bounds = array<i64: 1, 512>}, {pipeline_mode = #tpu.pipeline_mode<synchronous>, transform_indices = @transform_3, window_bounds = array<i64: 512, 128>}, {pipeline_mode = #tpu.pipeline_mode<synchronous>, transform_indices = @transform_4, window_bounds = array<i64: 1, 128>}, {pipeline_mode = #tpu.pipeline_mode<synchronous>, transform_indices = @transform_5, window_bounds = array<i64: 1, 128>}, {transform_indices = @transform_6, window_bounds = array<i64: 1>}, {transform_indices = @transform_7, window_bounds = array<i64: 1, 128>}]} {
    %c0 = arith.constant 0 : index
    %c0_0 = arith.constant 0 : index
    %0 = vector.load %arg1[%c0, %c0_0] : memref<128x32xf32, #tpu.memory_space<vmem>>, vector<128x32xf32>
    %1 = arith.truncf %0 : vector<128x32xf32> to vector<128x32xbf16>
    %c0_1 = arith.constant 0 : index
    %c0_2 = arith.constant 0 : index
    %2 = vector.load %arg2[%c0_1, %c0_2] : memref<32x512xbf16, #tpu.memory_space<vmem>>, vector<32x512xbf16>
    %cst = arith.constant dense<0.000000e+00> : vector<128x512xf32>
    %3 = tpu.matmul %1, %2, %cst {dimension_numbers = #tpu.dot_dimension_numbers<[1], [0], [0], [1], [0, 0, 1, 1], [], []>} : vector<128x32xbf16>, vector<32x512xbf16>, vector<128x512xf32> -> vector<128x512xf32>
    %4 = arith.truncf %3 : vector<128x512xf32> to vector<128x512xbf16>
    %c0_3 = arith.constant 0 : index
    %c0_4 = arith.constant 0 : index
    %5 = vector.load %arg3[%c0_3, %c0_4] : memref<1x512xbf16, #tpu.memory_space<vmem>>, vector<1x512xbf16>
    %6 = vector.broadcast %5 : vector<1x512xbf16> to vector<128x512xbf16>
    %7 = arith.addf %4, %6 : vector<128x512xbf16>
    %cst_5 = arith.constant 0.000000e+00 : bf16
    %8 = vector.broadcast %cst_5 : bf16 to vector<128x512xbf16>
    %9 = arith.maximumf %7, %8 : vector<128x512xbf16>
    %c0_6 = arith.constant 0 : index
    %c0_7 = arith.constant 0 : index
    %10 = vector.load %arg4[%c0_6, %c0_7] : memref<512x128xbf16, #tpu.memory_space<vmem>>, vector<512x128xbf16>
    %cst_8 = arith.constant dense<0.000000e+00> : vector<128x128xf32>
    %11 = tpu.matmul %9, %10, %cst_8 {dimension_numbers = #tpu.dot_dimension_numbers<[1], [0], [0], [1], [0, 0, 1, 1], [], []>} : vector<128x512xbf16>, vector<512x128xbf16>, vector<128x128xf32> -> vector<128x128xf32>
    %c0_9 = arith.constant 0 : index
    %c0_10 = arith.constant 0 : index
    %12 = vector.load %arg5[%c0_9, %c0_10] : memref<1x128xf32, #tpu.memory_space<vmem>>, vector<1x128xf32>
    %13 = vector.broadcast %12 : vector<1x128xf32> to vector<128x128xf32>
    %14 = arith.addf %11, %13 : vector<128x128xf32>
    %cst_11 = arith.constant 0.000000e+00 : f32
    %15 = vector.broadcast %cst_11 : f32 to vector<128x128xf32>
    %16 = arith.maximumf %14, %15 : vector<128x128xf32>
    %c0_12 = arith.constant 0 : index
    %c0_13 = arith.constant 0 : index
    %17 = vector.load %arg6[%c0_12, %c0_13] : memref<1x128xf32, #tpu.memory_space<vmem>>, vector<1x128xf32>
    %18 = vector.broadcast %17 : vector<1x128xf32> to vector<128x128xf32>
    %19 = arith.mulf %16, %18 : vector<128x128xf32>
    %cst_14 = arith.constant dense<0.000000e+00> : vector<128xf32>
    %20 = vector.multi_reduction <add>, %19, %cst_14 [1] : vector<128x128xf32> to vector<128xf32>
    %c0_15 = arith.constant 0 : index
    %21 = memref.load %arg7[%c0_15] : memref<1xf32, #tpu.memory_space<smem>>
    %22 = vector.broadcast %21 : f32 to vector<128xf32>
    %23 = arith.addf %20, %22 : vector<128xf32>
    %cst_16 = arith.constant 0.000000e+00 : f32
    %24 = vector.broadcast %cst_16 : f32 to vector<128xf32>
    %25 = arith.subf %24, %23 : vector<128xf32>
    %26 = math.exp %25 : vector<128xf32>
    %cst_17 = arith.constant 1.000000e+00 : f32
    %27 = vector.broadcast %cst_17 : f32 to vector<128xf32>
    %28 = arith.addf %27, %26 : vector<128xf32>
    %29 = tpu.reciprocal %28 {approx = true} : vector<128xf32> -> vector<128xf32>
    %30 = vector.shape_cast %29 : vector<128xf32> to vector<1x128xf32>
    %c0_18 = arith.constant 0 : index
    %c0_19 = arith.constant 0 : index
    %31 = vector.load %arg8[%c0_18, %c0_19] : memref<1x128xf32, #tpu.memory_space<vmem>>, vector<1x128xf32>
    tpu.vector_store %arg8[%c0_18, %c0_19], %30 {strides = array<i32>} : memref<1x128xf32, #tpu.memory_space<vmem>>, vector<1x128xf32>,
    return
  }
  func.func @transform_0(%arg0: i32) -> (i32, i32) {
    %c0_i32 = arith.constant 0 : i32
    %c0_i32_0 = arith.constant 0 : i32
    return %arg0, %c0_i32 : i32, i32
  }
  func.func @transform_1(%arg0: i32) -> (i32, i32) {
    %c0_i32 = arith.constant 0 : i32
    %c0_i32_0 = arith.constant 0 : i32
    %c0_i32_1 = arith.constant 0 : i32
    return %c0_i32, %c0_i32_0 : i32, i32
  }
  func.func @transform_2(%arg0: i32) -> (i32, i32) {
    %c0_i32 = arith.constant 0 : i32
    %c0_i32_0 = arith.constant 0 : i32
    %c0_i32_1 = arith.constant 0 : i32
    return %c0_i32, %c0_i32_0 : i32, i32
  }
  func.func @transform_3(%arg0: i32) -> (i32, i32) {
    %c0_i32 = arith.constant 0 : i32
    %c0_i32_0 = arith.constant 0 : i32
    %c0_i32_1 = arith.constant 0 : i32
    return %c0_i32, %c0_i32_0 : i32, i32
  }
  func.func @transform_4(%arg0: i32) -> (i32, i32) {
    %c0_i32 = arith.constant 0 : i32
    %c0_i32_0 = arith.constant 0 : i32
    %c0_i32_1 = arith.constant 0 : i32
    return %c0_i32, %c0_i32_0 : i32, i32
  }
  func.func @transform_5(%arg0: i32) -> (i32, i32) {
    %c0_i32 = arith.constant 0 : i32
    %c0_i32_0 = arith.constant 0 : i32
    %c0_i32_1 = arith.constant 0 : i32
    return %c0_i32, %c0_i32_0 : i32, i32
  }
  func.func @transform_6(%arg0: i32) -> i32 {
    %c0_i32 = arith.constant 0 : i32
    %c0_i32_0 = arith.constant 0 : i32
    return %c0_i32 : i32
  }
  func.func @transform_7(%arg0: i32) -> (i32, i32) {
    %c0_i32 = arith.constant 0 : i32
    %c0_i32_0 = arith.constant 0 : i32
    return %c0_i32, %arg0 : i32, i32
  }
}

</mosaic_0001>

<llo_original>
// kernel: _forward.1
$region0: #{_forward.1}
  #allocation0 [shape = 'u32[]', space=smem, size = 0x4, offset = 0x4, fixed_abs, tag = 'smem constant byte address 0x4 - core index']
  #allocation1 [shape = 'u32[144,128]{1,0:T(1,128)}', space=vmem, size = 0x12000, scoped, tag = 'internal scratch']
  #allocation2 [shape = 'f32[1]{0:T(128)S(6)}', space=smem, size = 0x200, scoped, tag = 'scoped memory for _forward.1']
  %s0 = inlined_call_operand.hbm [shape: f32[8,32], index: 0, kind: input, shape index: {}]
  %s1 = inlined_call_operand.hbm [shape: bf16[32,512], index: 1, kind: input, shape index: {}]
  %s2 = inlined_call_operand.vmem [shape: bf16[1,512], index: 2, kind: input, shape index: {}]
  %s3 = inlined_call_operand.hbm [shape: bf16[512,128], index: 3, kind: input, shape index: {}]
  %s4 = inlined_call_operand.vmem [shape: f32[1,128], index: 4, kind: input, shape index: {}]
  %s5 = inlined_call_operand.vmem [shape: f32[1,128], index: 5, kind: input, shape index: {}]
  %s6 = inlined_call_operand.<no memory space> [shape: f32[1], index: 6, kind: input, shape index: {}]
  %s7 = inlined_call_operand.vmem [shape: f32[1,128], index: 7, kind: output, shape index: {}]
  %s8 = sld [smem:[#allocation0]]
  $region50: #{_forward.1} parent=0
    _
  %s10 = ssub.s32 1, %s8
  %s11 = scalar_select 0, %s10, %s8
  %12 = sst [smem:[#allocation2]] %s6
  $region1: #{_forward.1} parent=0
    #allocation3 [shape = 'u8[65536]{0}', space=vmem, size = 0x10000, scoped, tag = 'input window, operand 0, single buffered']
    #allocation4 [shape = 's32[1]{0}', space=sflag, size = 0x4, scoped, tag = 'scoped memory for _forward.1']
    #allocation5 [shape = 'u8[32768]{0}', space=vmem, size = 0x8000, scoped, tag = 'input window, operand 1, single buffered']
    #allocation6 [shape = 's32[1]{0}', space=sflag, size = 0x4, scoped, tag = 'scoped memory for _forward.1']
    #allocation7 [shape = 'u8[131072]{0}', space=vmem, size = 0x20000, scoped, tag = 'input window, operand 3, single buffered']
    %13 = vsyncpa [#allocation4], 0
    %14 = vsyncpa [#allocation6], 0
    // Predicated region
    $region2: #{_forward.1} parent=1 // pred_check
      _
    $region3: #{_forward.1} parent=1 // pred_check_branch
      %16 = sbr.rel (0) target = $region5
    $region4: #{_forward.1} parent=1 // pred_region
      %s18 = ssub.s32 2048, 128
      %19 = vsyncadd [#allocation4], %s18
      %s20 = sshll.u32 [#allocation3], 4
      %s21 = int_to_ptr.vmem [resolvable:$true] %s20
      %26 = dma.hbm_to_vmem [thread:$0]  %s0, 128, %s21, [#allocation4], 128, 128, 8
    $region5: #{_forward.1} parent=1 // pred_fallthru
      _
    // Predicated region
    $region6: #{_forward.1} parent=1 // pred_check
      _
    $region7: #{_forward.1} parent=1 // pred_check_branch
      %28 = sbr.rel (0) target = $region9
    $region8: #{_forward.1} parent=1 // pred_region
      %s30 = ssub.s32 1024, 1024
      %31 = vsyncadd [#allocation6], %s30
      %s32 = sshll.u32 [#allocation5], 4
      %s33 = int_to_ptr.vmem [resolvable:$true] %s32
      %38 = dma.hbm_to_vmem [thread:$0]  %s1, 1024, %s33, [#allocation6], 256, 256, 16
    $region9: #{_forward.1} parent=1 // pred_fallthru
      _
    // Predicated region
    $region10: #{_forward.1} parent=1 // pred_check
      _
    $region11: #{_forward.1} parent=1 // pred_check_branch
      %40 = sbr.rel (0) target = $region13
    $region12: #{_forward.1} parent=1 // pred_region
      _
    $region13: #{_forward.1} parent=1 // pred_fallthru
      _
    // Predicated region
    $region14: #{_forward.1} parent=1 // pred_check
      _
    $region15: #{_forward.1} parent=1 // pred_check_branch
      %42 = sbr.rel (0) target = $region17
    $region16: #{_forward.1} parent=1 // pred_region
      %s44 = ssub.s32 4096, 4096
      %45 = vsyncadd [#allocation6], %s44
      %s46 = sshll.u32 [#allocation7], 4
      %s47 = int_to_ptr.vmem [resolvable:$true] %s46
      %52 = dma.hbm_to_vmem [thread:$0]  %s3, 4096, %s47, [#allocation6], 64, 64, 4
    $region17: #{_forward.1} parent=1 // pred_fallthru
      _
    // Predicated region
    $region18: #{_forward.1} parent=1 // pred_check
      _
    $region19: #{_forward.1} parent=1 // pred_check_branch
      %54 = sbr.rel (0) target = $region21
    $region20: #{_forward.1} parent=1 // pred_region
      _
    $region21: #{_forward.1} parent=1 // pred_fallthru
      _
    // Predicated region
    $region22: #{_forward.1} parent=1 // pred_check
      _
    $region23: #{_forward.1} parent=1 // pred_check_branch
      %56 = sbr.rel (0) target = $region25
    $region24: #{_forward.1} parent=1 // pred_region
      _
    $region25: #{_forward.1} parent=1 // pred_fallthru
      _
    // Predicated region
    $region26: #{_forward.1} parent=1 // pred_check
      _
    $region27: #{_forward.1} parent=1 // pred_check_branch
      %58 = sbr.rel (0) target = $region29
    $region28: #{_forward.1} parent=1 // pred_region
      _
    $region29: #{_forward.1} parent=1 // pred_fallthru
      _
    // Predicated region
    $region30: #{_forward.1} parent=1 // pred_check
      _
    $region31: #{_forward.1} parent=1 // pred_check_branch
      %60 = sbr.rel (0) target = $region33
    $region32: #{_forward.1} parent=1 // pred_region
      %61 = dma.done [#allocation4], 2048
    $region33: #{_forward.1} parent=1 // pred_fallthru
      _
    // Predicated region
    $region34: #{_forward.1} parent=1 // pred_check
      _
    $region35: #{_forward.1} parent=1 // pred_check_branch
      %63 = sbr.rel (0) target = $region37
    $region36: #{_forward.1} parent=1 // pred_region
      %64 = dma.done [#allocation6], 1024
    $region37: #{_forward.1} parent=1 // pred_fallthru
      _
    // Predicated region
    $region38: #{_forward.1} parent=1 // pred_check
      _
    $region39: #{_forward.1} parent=1 // pred_check_branch
      %66 = sbr.rel (0) target = $region41
    $region40: #{_forward.1} parent=1 // pred_region
      %67 = dma.done [#allocation6], 4096
    $region41: #{_forward.1} parent=1 // pred_fallthru
      _
    %v69 = vld [vmem:[#allocation3] sm:$0xff]
    %v70 = vld [vmem:[#allocation3 + $0x8] sm:$0xff]
    %v71 = vld [vmem:[#allocation3 + $0x10] sm:$0xff]
    %v72 = vld [vmem:[#allocation3 + $0x18] sm:$0xff]
    %v73 = vld [vmem:[#allocation3 + $0x20] sm:$0xff]
    %v74 = vld [vmem:[#allocation3 + $0x28] sm:$0xff]
    %v75 = vld [vmem:[#allocation3 + $0x30] sm:$0xff]
    %v76 = vld [vmem:[#allocation3 + $0x38] sm:$0xff]
    %v77 = vld [vmem:[#allocation3 + $0x40] sm:$0xff]
    %v78 = vld [vmem:[#allocation3 + $0x48] sm:$0xff]
    %v79 = vld [vmem:[#allocation3 + $0x50] sm:$0xff]
    %v80 = vld [vmem:[#allocation3 + $0x58] sm:$0xff]
    %v81 = vld [vmem:[#allocation3 + $0x60] sm:$0xff]
    %v82 = vld [vmem:[#allocation3 + $0x68] sm:$0xff]
    %v83 = vld [vmem:[#allocation3 + $0x70] sm:$0xff]
    %v84 = vld [vmem:[#allocation3 + $0x78] sm:$0xff]
    %v85 = vpack.c.bf16 %v70, %v69
    %v86 = vpack.c.bf16 %v72, %v71
    %v87 = vpack.c.bf16 %v74, %v73
    %v88 = vpack.c.bf16 %v76, %v75
    %v89 = vpack.c.bf16 %v78, %v77
    %v90 = vpack.c.bf16 %v80, %v79
    %v91 = vpack.c.bf16 %v82, %v81
    %v92 = vpack.c.bf16 %v84, %v83
    %v93 = vld [vmem:[#allocation5] sm:$0xff]
    %v94 = vld [vmem:[#allocation5 + $0x8] sm:$0xff]
    %v95 = vld [vmem:[#allocation5 + $0x10] sm:$0xff]
    %v96 = vld [vmem:[#allocation5 + $0x18] sm:$0xff]
    %v97 = vld [vmem:[#allocation5 + $0x20] sm:$0xff]
    %v98 = vld [vmem:[#allocation5 + $0x28] sm:$0xff]
    %v99 = vld [vmem:[#allocation5 + $0x30] sm:$0xff]
    %v100 = vld [vmem:[#allocation5 + $0x38] sm:$0xff]
    %v109 = vunpack.c.l.b16 %v93
    %v110 = vunpack.c.h.b16 %v93
    %v111 = vunpack.c.l.b16 %v94
    %v112 = vunpack.c.h.b16 %v94
    %v113 = vunpack.c.l.b16 %v95
    %v114 = vunpack.c.h.b16 %v95
    %v115 = vunpack.c.l.b16 %v96
    %v116 = vunpack.c.h.b16 %v96
    %v117 = vunpack.c.l.b16 %v97
    %v118 = vunpack.c.h.b16 %v97
    %v119 = vunpack.c.l.b16 %v98
    %v120 = vunpack.c.h.b16 %v98
    %v121 = vunpack.c.l.b16 %v99
    %v122 = vunpack.c.h.b16 %v99
    %v123 = vunpack.c.l.b16 %v100
    %v124 = vunpack.c.h.b16 %v100
    %v125 = vpack.c.b16 %v113, %v109
    %v126 = vpack.c.b16 %v114, %v110
    %v127 = vpack.c.b16 %v115, %v111
    %v128 = vpack.c.b16 %v116, %v112
    %v129 = vpack.c.b16 %v121, %v117
    %v130 = vpack.c.b16 %v122, %v118
    %v131 = vpack.c.b16 %v123, %v119
    %v132 = vpack.c.b16 %v124, %v120
    %vm141 = vcmask 261120
    %v143 = vsel %vm141, %v85, 0
    %v146 = vsel %vm141, %v86, 0
    %v149 = vsel %vm141, %v87, 0
    %v152 = vsel %vm141, %v88, 0
    %v155 = vsel %vm141, %v89, 0
    %v158 = vsel %vm141, %v90, 0
    %v161 = vsel %vm141, %v91, 0
    %v164 = vsel %vm141, %v92, 0
    %166 = vmatprep.subr.bf16.mxu0 %v126
    %167 = vmatpush1.bf16.msra.mxu0 %v125
    %168 = vmatprep.subr.bf16.mxu0 %v130
    %169 = vmatpush1.bf16.msra.mxu0 %v129
    %170 = vmatprep.subr.bf16.mxu0 0
    %171 = vmatpush1.bf16.msra.mxu0 0
    %172 = vmatprep.subr.bf16.mxu0 0
    %173 = vmatpush1.bf16.msra.mxu0 0
    %174 = vmatprep.subr.bf16.mxu0 0
    %175 = vmatpush1.bf16.msra.mxu0 0
    %176 = vmatprep.subr.bf16.mxu0 0
    %177 = vmatpush1.bf16.msra.mxu0 0
    %178 = vmatprep.subr.bf16.mxu0 0
    %179 = vmatpush1.bf16.msra.mxu0 0
    %180 = vmatprep.subr.bf16.mxu0 0
    %181 = vmatpush1.bf16.msra.mxu0 0
    %182 = vmatprep.subr.bf16.mxu0 0
    %183 = vmatpush1.bf16.msra.mxu0 0
    %184 = vmatprep.subr.bf16.mxu0 0
    %185 = vmatpush1.bf16.msra.mxu0 0
    %186 = vmatprep.subr.bf16.mxu0 0
    %187 = vmatpush1.bf16.msra.mxu0 0
    %188 = vmatprep.subr.bf16.mxu0 0
    %189 = vmatpush1.bf16.msra.mxu0 0
    %190 = vmatprep.subr.bf16.mxu0 0
    %191 = vmatpush1.bf16.msra.mxu0 0
    %192 = vmatprep.subr.bf16.mxu0 0
    %193 = vmatpush1.bf16.msra.mxu0 0
    %194 = vmatprep.subr.bf16.mxu0 0
    %195 = vmatpush1.bf16.msra.mxu0 0
    %196 = vmatprep.subr.bf16.mxu0 0
    %197 = vmatpush1.bf16.msra.mxu0 0
    %198 = vmatprep.mubr.bf16.mxu0 0
    %199 = vmatmul.mubr.bf16.gmra.mrb[0].mxu0 %v143
    %v200 = vpop.f32.mrb[0].mxu0
    %v201 = vadd.f32 0.0, %v200
    %v202 = vpop.f32.mrb[0].mxu0
    %v203 = vadd.f32 0.0, %v202
    %v204 = vpop.f32.mrb[0].mxu0
    %v205 = vadd.f32 0.0, %v204
    %v206 = vpop.f32.mrb[0].mxu0
    %v207 = vadd.f32 0.0, %v206
    %208 = vmatprep.mubr.bf16.mxu0 0
    %209 = vmatmul.mubr.bf16.gmra.mrb[0].mxu0 %v146
    %v210 = vpop.f32.mrb[0].mxu0
    %v211 = vadd.f32 0.0, %v210
    %v212 = vpop.f32.mrb[0].mxu0
    %v213 = vadd.f32 0.0, %v212
    %v214 = vpop.f32.mrb[0].mxu0
    %v215 = vadd.f32 0.0, %v214
    %v216 = vpop.f32.mrb[0].mxu0
    %v217 = vadd.f32 0.0, %v216
    %218 = vmatprep.mubr.bf16.mxu0 0
    %219 = vmatmul.mubr.bf16.gmra.mrb[0].mxu0 %v149
    %v220 = vpop.f32.mrb[0].mxu0
    %v221 = vadd.f32 0.0, %v220
    %v222 = vpop.f32.mrb[0].mxu0
    %v223 = vadd.f32 0.0, %v222
    %v224 = vpop.f32.mrb[0].mxu0
    %v225 = vadd.f32 0.0, %v224
    %v226 = vpop.f32.mrb[0].mxu0
    %v227 = vadd.f32 0.0, %v226
    %228 = vmatprep.mubr.bf16.mxu0 0
    %229 = vmatmul.mubr.bf16.gmra.mrb[0].mxu0 %v152
    %v230 = vpop.f32.mrb[0].mxu0
    %v231 = vadd.f32 0.0, %v230
    %v232 = vpop.f32.mrb[0].mxu0
    %v233 = vadd.f32 0.0, %v232
    %v234 = vpop.f32.mrb[0].mxu0
    %v235 = vadd.f32 0.0, %v234
    %v236 = vpop.f32.mrb[0].mxu0
    %v237 = vadd.f32 0.0, %v236
    %238 = vmatprep.mubr.bf16.mxu0 0
    %239 = vmatmul.mubr.bf16.gmra.mrb[0].mxu0 %v155
    %v240 = vpop.f32.mrb[0].mxu0
    %v241 = vadd.f32 0.0, %v240
    %v242 = vpop.f32.mrb[0].mxu0
    %v243 = vadd.f32 0.0, %v242
    %v244 = vpop.f32.mrb[0].mxu0
    %v245 = vadd.f32 0.0, %v244
    %v246 = vpop.f32.mrb[0].mxu0
    %v247 = vadd.f32 0.0, %v246
    %248 = vmatprep.mubr.bf16.mxu0 0
    %249 = vmatmul.mubr.bf16.gmra.mrb[0].mxu0 %v158
    %v250 = vpop.f32.mrb[0].mxu0
    %v251 = vadd.f32 0.0, %v250
    %v252 = vpop.f32.mrb[0].mxu0
    %v253 = vadd.f32 0.0, %v252
    %v254 = vpop.f32.mrb[0].mxu0
    %v255 = vadd.f32 0.0, %v254
    %v256 = vpop.f32.mrb[0].mxu0
    %v257 = vadd.f32 0.0, %v256
    %258 = vmatprep.mubr.bf16.mxu0 0
    %259 = vmatmul.mubr.bf16.gmra.mrb[0].mxu0 %v161
    %v260 = vpop.f32.mrb[0].mxu0
    %v261 = vadd.f32 0.0, %v260
    %v262 = vpop.f32.mrb[0].mxu0
    %v263 = vadd.f32 0.0, %v262
    %v264 = vpop.f32.mrb[0].mxu0
    %v265 = vadd.f32 0.0, %v264
    %v266 = vpop.f32.mrb[0].mxu0
    %v267 = vadd.f32 0.0, %v266
    %268 = vmatprep.mubr.bf16.mxu0 0
    %269 = vmatmul.mubr.bf16.gmra.mrb[0].mxu0 %v164
    %v270 = vpop.f32.mrb[0].mxu0
    %v271 = vadd.f32 0.0, %v270
    %v272 = vpop.f32.mrb[0].mxu0
    %v273 = vadd.f32 0.0, %v272
    %v274 = vpop.f32.mrb[0].mxu0
    %v275 = vadd.f32 0.0, %v274
    %v276 = vpop.f32.mrb[0].mxu0
    %v277 = vadd.f32 0.0, %v276
    %278 = vdwg.mxu0
    %279 = vmatprep.subr.bf16.mxu0 %v128
    %280 = vmatpush1.bf16.msra.mxu0 %v127
    %281 = vmatprep.subr.bf16.mxu0 %v132
    %282 = vmatpush1.bf16.msra.mxu0 %v131
    %283 = vmatprep.subr.bf16.mxu0 0
    %284 = vmatpush1.bf16.msra.mxu0 0
    %285 = vmatprep.subr.bf16.mxu0 0
    %286 = vmatpush1.bf16.msra.mxu0 0
    %287 = vmatprep.subr.bf16.mxu0 0
    %288 = vmatpush1.bf16.msra.mxu0 0
    %289 = vmatprep.subr.bf16.mxu0 0
    %290 = vmatpush1.bf16.msra.mxu0 0
    %291 = vmatprep.subr.bf16.mxu0 0
    %292 = vmatpush1.bf16.msra.mxu0 0
    %293 = vmatprep.subr.bf16.mxu0 0
    %294 = vmatpush1.bf16.msra.mxu0 0
    %295 = vmatprep.subr.bf16.mxu0 0
    %296 = vmatpush1.bf16.msra.mxu0 0
    %297 = vmatprep.subr.bf16.mxu0 0
    %298 = vmatpush1.bf16.msra.mxu0 0
    %299 = vmatprep.subr.bf16.mxu0 0
    %300 = vmatpush1.bf16.msra.mxu0 0
    %301 = vmatprep.subr.bf16.mxu0 0
    %302 = vmatpush1.bf16.msra.mxu0 0
    %303 = vmatprep.subr.bf16.mxu0 0
    %304 = vmatpush1.bf16.msra.mxu0 0
    %305 = vmatprep.subr.bf16.mxu0 0
    %306 = vmatpush1.bf16.msra.mxu0 0
    %307 = vmatprep.subr.bf16.mxu0 0
    %308 = vmatpush1.bf16.msra.mxu0 0
    %309 = vmatprep.subr.bf16.mxu0 0
    %310 = vmatpush1.bf16.msra.mxu0 0
    %311 = vmatprep.mubr.bf16.mxu0 0
    %312 = vmatmul.mubr.bf16.gmra.mrb[0].mxu0 %v143
    %v313 = vpop.f32.mrb[0].mxu0
    %v314 = vadd.f32 0.0, %v313
    %v315 = vpop.f32.mrb[0].mxu0
    %v316 = vadd.f32 0.0, %v315
    %v317 = vpop.f32.mrb[0].mxu0
    %v318 = vadd.f32 0.0, %v317
    %v319 = vpop.f32.mrb[0].mxu0
    %v320 = vadd.f32 0.0, %v319
    %321 = vmatprep.mubr.bf16.mxu0 0
    %322 = vmatmul.mubr.bf16.gmra.mrb[0].mxu0 %v146
    %v323 = vpop.f32.mrb[0].mxu0
    %v324 = vadd.f32 0.0, %v323
    %v325 = vpop.f32.mrb[0].mxu0
    %v326 = vadd.f32 0.0, %v325
    %v327 = vpop.f32.mrb[0].mxu0
    %v328 = vadd.f32 0.0, %v327
    %v329 = vpop.f32.mrb[0].mxu0
    %v330 = vadd.f32 0.0, %v329
    %331 = vmatprep.mubr.bf16.mxu0 0
    %332 = vmatmul.mubr.bf16.gmra.mrb[0].mxu0 %v149
    %v333 = vpop.f32.mrb[0].mxu0
    %v334 = vadd.f32 0.0, %v333
    %v335 = vpop.f32.mrb[0].mxu0
    %v336 = vadd.f32 0.0, %v335
    %v337 = vpop.f32.mrb[0].mxu0
    %v338 = vadd.f32 0.0, %v337
    %v339 = vpop.f32.mrb[0].mxu0
    %v340 = vadd.f32 0.0, %v339
    %341 = vmatprep.mubr.bf16.mxu0 0
    %342 = vmatmul.mubr.bf16.gmra.mrb[0].mxu0 %v152
    %v343 = vpop.f32.mrb[0].mxu0
    %v344 = vadd.f32 0.0, %v343
    %v345 = vpop.f32.mrb[0].mxu0
    %v346 = vadd.f32 0.0, %v345
    %v347 = vpop.f32.mrb[0].mxu0
    %v348 = vadd.f32 0.0, %v347
    %v349 = vpop.f32.mrb[0].mxu0
    %v350 = vadd.f32 0.0, %v349
    %351 = vmatprep.mubr.bf16.mxu0 0
    %352 = vmatmul.mubr.bf16.gmra.mrb[0].mxu0 %v155
    %v353 = vpop.f32.mrb[0].mxu0
    %v354 = vadd.f32 0.0, %v353
    %v355 = vpop.f32.mrb[0].mxu0
    %v356 = vadd.f32 0.0, %v355
    %v357 = vpop.f32.mrb[0].mxu0
    %v358 = vadd.f32 0.0, %v357
    %v359 = vpop.f32.mrb[0].mxu0
    %v360 = vadd.f32 0.0, %v359
    %361 = vmatprep.mubr.bf16.mxu0 0
    %362 = vmatmul.mubr.bf16.gmra.mrb[0].mxu0 %v158
    %v363 = vpop.f32.mrb[0].mxu0
    %v364 = vadd.f32 0.0, %v363
    %v365 = vpop.f32.mrb[0].mxu0
    %v366 = vadd.f32 0.0, %v365
    %v367 = vpop.f32.mrb[0].mxu0
    %v368 = vadd.f32 0.0, %v367
    %v369 = vpop.f32.mrb[0].mxu0
    %v370 = vadd.f32 0.0, %v369
    %371 = vmatprep.mubr.bf16.mxu0 0
    %372 = vmatmul.mubr.bf16.gmra.mrb[0].mxu0 %v161
    %v373 = vpop.f32.mrb[0].mxu0
    %v374 = vadd.f32 0.0, %v373
    %v375 = vpop.f32.mrb[0].mxu0
    %v376 = vadd.f32 0.0, %v375
    %v377 = vpop.f32.mrb[0].mxu0
    %v378 = vadd.f32 0.0, %v377
    %v379 = vpop.f32.mrb[0].mxu0
    %v380 = vadd.f32 0.0, %v379
    %381 = vmatprep.mubr.bf16.mxu0 0
    %382 = vmatmul.mubr.bf16.gmra.mrb[0].mxu0 %v164
    %v383 = vpop.f32.mrb[0].mxu0
    %v384 = vadd.f32 0.0, %v383
    %v385 = vpop.f32.mrb[0].mxu0
    %v386 = vadd.f32 0.0, %v385
    %v387 = vpop.f32.mrb[0].mxu0
    %v388 = vadd.f32 0.0, %v387
    %v389 = vpop.f32.mrb[0].mxu0
    %v390 = vadd.f32 0.0, %v389
    %391 = vdwg.mxu0
    %v392 = vpack.c.bf16 %v205, %v201
    %v393 = vpack.c.bf16 %v207, %v203
    %v394 = vpack.c.bf16 %v318, %v314
    %v395 = vpack.c.bf16 %v320, %v316
    %v396 = vpack.c.bf16 %v215, %v211
    %v397 = vpack.c.bf16 %v217, %v213
    %v398 = vpack.c.bf16 %v328, %v324
    %v399 = vpack.c.bf16 %v330, %v326
    %v400 = vpack.c.bf16 %v225, %v221
    %v401 = vpack.c.bf16 %v227, %v223
    %v402 = vpack.c.bf16 %v338, %v334
    %v403 = vpack.c.bf16 %v340, %v336
    %v404 = vpack.c.bf16 %v235, %v231
    %v405 = vpack.c.bf16 %v237, %v233
    %v406 = vpack.c.bf16 %v348, %v344
    %v407 = vpack.c.bf16 %v350, %v346
    %v408 = vpack.c.bf16 %v245, %v241
    %v409 = vpack.c.bf16 %v247, %v243
    %v410 = vpack.c.bf16 %v358, %v354
    %v411 = vpack.c.bf16 %v360, %v356
    %v412 = vpack.c.bf16 %v255, %v251
    %v413 = vpack.c.bf16 %v257, %v253
    %v414 = vpack.c.bf16 %v368, %v364
    %v415 = vpack.c.bf16 %v370, %v366
    %v416 = vpack.c.bf16 %v265, %v261
    %v417 = vpack.c.bf16 %v267, %v263
    %v418 = vpack.c.bf16 %v378, %v374
    %v419 = vpack.c.bf16 %v380, %v376
    %v420 = vpack.c.bf16 %v275, %v271
    %v421 = vpack.c.bf16 %v277, %v273
    %v422 = vpack.c.bf16 %v388, %v384
    %v423 = vpack.c.bf16 %v390, %v386
    %v424 = vld [vmem:[%s2] sm:$0xf]
    %v427 = vunpack.c.l.s4 1966171168
    %v428 = vunpack.c.0.s8 %v427
    %v429 = vlaneseq
    %v430 = vshrl.u32 %v429, 7
    %v431 = vsub.s32 %v428, %v430
    %v432 = vrot.slane %v424, %v431
    %v433 = vcombine.high %v432, %v432
    %v435 = vunpack.c.l.s4 1966171168
    %v436 = vunpack.c.0.s8 %v435
    %v437 = vlaneseq
    %v438 = vshrl.u32 %v437, 7
    %v439 = vsub.s32 %v436, %v438
    %v440 = vrot.slane %v432, %v439
    %v442 = vunpack.c.l.s4 1966171168
    %v443 = vunpack.c.0.s8 %v442
    %v444 = vlaneseq
    %v445 = vshrl.u32 %v444, 7
    %v446 = vsub.s32 %v443, %v445
    %v447 = vrot.slane %v433, %v446
    %v448 = vcombine.high %v440, %v440
    %v449 = vcombine.high %v447, %v447
    %v451 = vpack.i.b16 %v440, %v440
    %v453 = vlaneseq
    %v454 = vshrl.u32 %v453, 7
    %v455 = vsub.s32 0, %v454
    %v456 = vrot.slane %v451, %v455
    %v458 = vpack.i.b16 %v447, %v447
    %v460 = vlaneseq
    %v461 = vshrl.u32 %v460, 7
    %v462 = vsub.s32 0, %v461
    %v463 = vrot.slane %v458, %v462
    %v465 = vpack.i.b16 %v448, %v448
    %v467 = vlaneseq
    %v468 = vshrl.u32 %v467, 7
    %v469 = vsub.s32 0, %v468
    %v470 = vrot.slane %v465, %v469
    %v472 = vpack.i.b16 %v449, %v449
    %v474 = vlaneseq
    %v475 = vshrl.u32 %v474, 7
    %v476 = vsub.s32 0, %v475
    %v477 = vrot.slane %v472, %v476
    %v478 = vadd.bf16 %v392, %v456
    %v479 = vadd.bf16 %v393, %v463
    %v480 = vadd.bf16 %v394, %v470
    %v481 = vadd.bf16 %v395, %v477
    %v482 = vadd.bf16 %v396, %v456
    %v483 = vadd.bf16 %v397, %v463
    %v484 = vadd.bf16 %v398, %v470
    %v485 = vadd.bf16 %v399, %v477
    %v486 = vadd.bf16 %v400, %v456
    %v487 = vadd.bf16 %v401, %v463
    %v488 = vadd.bf16 %v402, %v470
    %v489 = vadd.bf16 %v403, %v477
    %v490 = vadd.bf16 %v404, %v456
    %v491 = vadd.bf16 %v405, %v463
    %v492 = vadd.bf16 %v406, %v470
    %v493 = vadd.bf16 %v407, %v477
    %v494 = vadd.bf16 %v408, %v456
    %v495 = vadd.bf16 %v409, %v463
    %v496 = vadd.bf16 %v410, %v470
    %v497 = vadd.bf16 %v411, %v477
    %v498 = vadd.bf16 %v412, %v456
    %v499 = vadd.bf16 %v413, %v463
    %v500 = vadd.bf16 %v414, %v470
    %v501 = vadd.bf16 %v415, %v477
    %v502 = vadd.bf16 %v416, %v456
    %v503 = vadd.bf16 %v417, %v463
    %v504 = vadd.bf16 %v418, %v470
    %v505 = vadd.bf16 %v419, %v477
    %v506 = vadd.bf16 %v420, %v456
    %v507 = vadd.bf16 %v421, %v463
    %v508 = vadd.bf16 %v422, %v470
    %v509 = vadd.bf16 %v423, %v477
    %v510 = vmax.bf16 %v478, 0
    %v511 = vmax.bf16 %v479, 0
    %v512 = vmax.bf16 %v480, 0
    %v513 = vmax.bf16 %v481, 0
    %v514 = vmax.bf16 %v482, 0
    %v515 = vmax.bf16 %v483, 0
    %v516 = vmax.bf16 %v484, 0
    %v517 = vmax.bf16 %v485, 0
    %v518 = vmax.bf16 %v486, 0
    %v519 = vmax.bf16 %v487, 0
    %v520 = vmax.bf16 %v488, 0
    %v521 = vmax.bf16 %v489, 0
    %v522 = vmax.bf16 %v490, 0
    %v523 = vmax.bf16 %v491, 0
    %v524 = vmax.bf16 %v492, 0
    %v525 = vmax.bf16 %v493, 0
    %v526 = vmax.bf16 %v494, 0
    %v527 = vmax.bf16 %v495, 0
    %v528 = vmax.bf16 %v496, 0
    %v529 = vmax.bf16 %v497, 0
    %v530 = vmax.bf16 %v498, 0
    %v531 = vmax.bf16 %v499, 0
    %v532 = vmax.bf16 %v500, 0
    %v533 = vmax.bf16 %v501, 0
    %v534 = vmax.bf16 %v502, 0
    %v535 = vmax.bf16 %v503, 0
    %v536 = vmax.bf16 %v504, 0
    %v537 = vmax.bf16 %v505, 0
    %v538 = vmax.bf16 %v506, 0
    %v539 = vmax.bf16 %v507, 0
    %v540 = vmax.bf16 %v508, 0
    %v541 = vmax.bf16 %v509, 0
    %v542 = vld [vmem:[#allocation7] sm:$0xf]
    %v543 = vld [vmem:[#allocation7 + $0x4] sm:$0xf]
    %v544 = vld [vmem:[#allocation7 + $0x8] sm:$0xf]
    %v545 = vld [vmem:[#allocation7 + $0xc] sm:$0xf]
    %v546 = vld [vmem:[#allocation7 + $0x10] sm:$0xf]
    %v547 = vld [vmem:[#allocation7 + $0x14] sm:$0xf]
    %v548 = vld [vmem:[#allocation7 + $0x18] sm:$0xf]
    %v549 = vld [vmem:[#allocation7 + $0x1c] sm:$0xf]
    %v550 = vld [vmem:[#allocation7 + $0x20] sm:$0xf]
    %v551 = vld [vmem:[#allocation7 + $0x24] sm:$0xf]
    %v552 = vld [vmem:[#allocation7 + $0x28] sm:$0xf]
    %v553 = vld [vmem:[#allocation7 + $0x2c] sm:$0xf]
    %v554 = vld [vmem:[#allocation7 + $0x30] sm:$0xf]
    %v555 = vld [vmem:[#allocation7 + $0x34] sm:$0xf]
    %v556 = vld [vmem:[#allocation7 + $0x38] sm:$0xf]
    %v557 = vld [vmem:[#allocation7 + $0x3c] sm:$0xf]
    %v558 = vld [vmem:[#allocation7 + $0x40] sm:$0xf]
    %v559 = vld [vmem:[#allocation7 + $0x44] sm:$0xf]
    %v560 = vld [vmem:[#allocation7 + $0x48] sm:$0xf]
    %v561 = vld [vmem:[#allocation7 + $0x4c] sm:$0xf]
    %v562 = vld [vmem:[#allocation7 + $0x50] sm:$0xf]
    %v563 = vld [vmem:[#allocation7 + $0x54] sm:$0xf]
    %v564 = vld [vmem:[#allocation7 + $0x58] sm:$0xf]
    %v565 = vld [vmem:[#allocation7 + $0x5c] sm:$0xf]
    %v566 = vld [vmem:[#allocation7 + $0x60] sm:$0xf]
    %v567 = vld [vmem:[#allocation7 + $0x64] sm:$0xf]
    %v568 = vld [vmem:[#allocation7 + $0x68] sm:$0xf]
    %v569 = vld [vmem:[#allocation7 + $0x6c] sm:$0xf]
    %v570 = vld [vmem:[#allocation7 + $0x70] sm:$0xf]
    %v571 = vld [vmem:[#allocation7 + $0x74] sm:$0xf]
    %v572 = vld [vmem:[#allocation7 + $0x78] sm:$0xf]
    %v573 = vld [vmem:[#allocation7 + $0x7c] sm:$0xf]
    %v574 = vld [vmem:[#allocation7 + $0x80] sm:$0xf]
    %v575 = vld [vmem:[#allocation7 + $0x84] sm:$0xf]
    %v576 = vld [vmem:[#allocation7 + $0x88] sm:$0xf]
    %v577 = vld [vmem:[#allocation7 + $0x8c] sm:$0xf]
    %v578 = vld [vmem:[#allocation7 + $0x90] sm:$0xf]
    %v579 = vld [vmem:[#allocation7 + $0x94] sm:$0xf]
    %v580 = vld [vmem:[#allocation7 + $0x98] sm:$0xf]
    %v581 = vld [vmem:[#allocation7 + $0x9c] sm:$0xf]
    %v582 = vld [vmem:[#allocation7 + $0xa0] sm:$0xf]
    %v583 = vld [vmem:[#allocation7 + $0xa4] sm:$0xf]
    %v584 = vld [vmem:[#allocation7 + $0xa8] sm:$0xf]
    %v585 = vld [vmem:[#allocation7 + $0xac] sm:$0xf]
    %v586 = vld [vmem:[#allocation7 + $0xb0] sm:$0xf]
    %v587 = vld [vmem:[#allocation7 + $0xb4] sm:$0xf]
    %v588 = vld [vmem:[#allocation7 + $0xb8] sm:$0xf]
    %v589 = vld [vmem:[#allocation7 + $0xbc] sm:$0xf]
    %v590 = vld [vmem:[#allocation7 + $0xc0] sm:$0xf]
    %v591 = vld [vmem:[#allocation7 + $0xc4] sm:$0xf]
    %v592 = vld [vmem:[#allocation7 + $0xc8] sm:$0xf]
    %v593 = vld [vmem:[#allocation7 + $0xcc] sm:$0xf]
    %v594 = vld [vmem:[#allocation7 + $0xd0] sm:$0xf]
    %v595 = vld [vmem:[#allocation7 + $0xd4] sm:$0xf]
    %v596 = vld [vmem:[#allocation7 + $0xd8] sm:$0xf]
    %v597 = vld [vmem:[#allocation7 + $0xdc] sm:$0xf]
    %v598 = vld [vmem:[#allocation7 + $0xe0] sm:$0xf]
    %v599 = vld [vmem:[#allocation7 + $0xe4] sm:$0xf]
    %v600 = vld [vmem:[#allocation7 + $0xe8] sm:$0xf]
    %v601 = vld [vmem:[#allocation7 + $0xec] sm:$0xf]
    %v602 = vld [vmem:[#allocation7 + $0xf0] sm:$0xf]
    %v603 = vld [vmem:[#allocation7 + $0xf4] sm:$0xf]
    %v604 = vld [vmem:[#allocation7 + $0xf8] sm:$0xf]
    %v605 = vld [vmem:[#allocation7 + $0xfc] sm:$0xf]
    %v606 = vld [vmem:[%s4] sm:$0x1]
    %v608 = vlaneseq
    %v609 = vshrl.u32 %v608, 7
    %v610 = vsub.s32 0, %v609
    %v611 = vrot.slane %v606, %v610
    %v677 = vunpack.c.l.b16 %v542
    %v678 = vunpack.c.l.b16 %v543
    %v679 = vunpack.c.l.b16 %v544
    %v680 = vunpack.c.l.b16 %v545
    %v681 = vunpack.c.l.b16 %v546
    %v682 = vunpack.c.l.b16 %v547
    %v683 = vunpack.c.l.b16 %v548
    %v684 = vunpack.c.l.b16 %v549
    %v685 = vunpack.c.l.b16 %v550
    %v686 = vunpack.c.l.b16 %v551
    %v687 = vunpack.c.l.b16 %v552
    %v688 = vunpack.c.l.b16 %v553
    %v689 = vunpack.c.l.b16 %v554
    %v690 = vunpack.c.l.b16 %v555
    %v691 = vunpack.c.l.b16 %v556
    %v692 = vunpack.c.l.b16 %v557
    %v693 = vunpack.c.l.b16 %v558
    %v694 = vunpack.c.l.b16 %v559
    %v695 = vunpack.c.l.b16 %v560
    %v696 = vunpack.c.l.b16 %v561
    %v697 = vunpack.c.l.b16 %v562
    %v698 = vunpack.c.l.b16 %v563
    %v699 = vunpack.c.l.b16 %v564
    %v700 = vunpack.c.l.b16 %v565
    %v701 = vunpack.c.l.b16 %v566
    %v702 = vunpack.c.l.b16 %v567
    %v703 = vunpack.c.l.b16 %v568
    %v704 = vunpack.c.l.b16 %v569
    %v705 = vunpack.c.l.b16 %v570
    %v706 = vunpack.c.l.b16 %v571
    %v707 = vunpack.c.l.b16 %v572
    %v708 = vunpack.c.l.b16 %v573
    %v709 = vunpack.c.l.b16 %v574
    %v710 = vunpack.c.l.b16 %v575
    %v711 = vunpack.c.l.b16 %v576
    %v712 = vunpack.c.l.b16 %v577
    %v713 = vunpack.c.l.b16 %v578
    %v714 = vunpack.c.l.b16 %v579
    %v715 = vunpack.c.l.b16 %v580
    %v716 = vunpack.c.l.b16 %v581
    %v717 = vunpack.c.l.b16 %v582
    %v718 = vunpack.c.l.b16 %v583
    %v719 = vunpack.c.l.b16 %v584
    %v720 = vunpack.c.l.b16 %v585
    %v721 = vunpack.c.l.b16 %v586
    %v722 = vunpack.c.l.b16 %v587
    %v723 = vunpack.c.l.b16 %v588
    %v724 = vunpack.c.l.b16 %v589
    %v725 = vunpack.c.l.b16 %v590
    %v726 = vunpack.c.l.b16 %v591
    %v727 = vunpack.c.l.b16 %v592
    %v728 = vunpack.c.l.b16 %v593
    %v729 = vunpack.c.l.b16 %v594
    %v730 = vunpack.c.l.b16 %v595
    %v731 = vunpack.c.l.b16 %v596
    %v732 = vunpack.c.l.b16 %v597
    %v733 = vunpack.c.l.b16 %v598
    %v734 = vunpack.c.l.b16 %v599
    %v735 = vunpack.c.l.b16 %v600
    %v736 = vunpack.c.l.b16 %v601
    %v737 = vunpack.c.l.b16 %v602
    %v738 = vunpack.c.l.b16 %v603
    %v739 = vunpack.c.l.b16 %v604
    %v740 = vunpack.c.l.b16 %v605
    %v741 = vpack.c.b16 %v678, %v677
    %v742 = vpack.c.b16 %v680, %v679
    %v743 = vpack.c.b16 %v682, %v681
    %v744 = vpack.c.b16 %v684, %v683
    %v745 = vpack.c.b16 %v686, %v685
    %v746 = vpack.c.b16 %v688, %v687
    %v747 = vpack.c.b16 %v690, %v689
    %v748 = vpack.c.b16 %v692, %v691
    %v749 = vpack.c.b16 %v694, %v693
    %v750 = vpack.c.b16 %v696, %v695
    %v751 = vpack.c.b16 %v698, %v697
    %v752 = vpack.c.b16 %v700, %v699
    %v753 = vpack.c.b16 %v702, %v701
    %v754 = vpack.c.b16 %v704, %v703
    %v755 = vpack.c.b16 %v706, %v705
    %v756 = vpack.c.b16 %v708, %v707
    %v757 = vpack.c.b16 %v710, %v709
    %v758 = vpack.c.b16 %v712, %v711
    %v759 = vpack.c.b16 %v714, %v713
    %v760 = vpack.c.b16 %v716, %v715
    %v761 = vpack.c.b16 %v718, %v717
    %v762 = vpack.c.b16 %v720, %v719
    %v763 = vpack.c.b16 %v722, %v721
    %v764 = vpack.c.b16 %v724, %v723
    %v765 = vpack.c.b16 %v726, %v725
    %v766 = vpack.c.b16 %v728, %v727
    %v767 = vpack.c.b16 %v730, %v729
    %v768 = vpack.c.b16 %v732, %v731
    %v769 = vpack.c.b16 %v734, %v733
    %v770 = vpack.c.b16 %v736, %v735
    %v771 = vpack.c.b16 %v738, %v737
    %v772 = vpack.c.b16 %v740, %v739
    %805 = vmatprep.subr.bf16.mxu0 0
    %806 = vmatpush1.bf16.msra.mxu0 %v741
    %807 = vmatprep.subr.bf16.mxu0 0
    %808 = vmatpush1.bf16.msra.mxu0 %v742
    %809 = vmatprep.subr.bf16.mxu0 0
    %810 = vmatpush1.bf16.msra.mxu0 %v743
    %811 = vmatprep.subr.bf16.mxu0 0
    %812 = vmatpush1.bf16.msra.mxu0 %v744
    %813 = vmatprep.subr.bf16.mxu0 0
    %814 = vmatpush1.bf16.msra.mxu0 %v745
    %815 = vmatprep.subr.bf16.mxu0 0
    %816 = vmatpush1.bf16.msra.mxu0 %v746
    %817 = vmatprep.subr.bf16.mxu0 0
    %818 = vmatpush1.bf16.msra.mxu0 %v747
    %819 = vmatprep.subr.bf16.mxu0 0
    %820 = vmatpush1.bf16.msra.mxu0 %v748
    %821 = vmatprep.subr.bf16.mxu0 0
    %822 = vmatpush1.bf16.msra.mxu0 %v749
    %823 = vmatprep.subr.bf16.mxu0 0
    %824 = vmatpush1.bf16.msra.mxu0 %v750
    %825 = vmatprep.subr.bf16.mxu0 0
    %826 = vmatpush1.bf16.msra.mxu0 %v751
    %827 = vmatprep.subr.bf16.mxu0 0
    %828 = vmatpush1.bf16.msra.mxu0 %v752
    %829 = vmatprep.subr.bf16.mxu0 0
    %830 = vmatpush1.bf16.msra.mxu0 %v753
    %831 = vmatprep.subr.bf16.mxu0 0
    %832 = vmatpush1.bf16.msra.mxu0 %v754
    %833 = vmatprep.subr.bf16.mxu0 0
    %834 = vmatpush1.bf16.msra.mxu0 %v755
    %835 = vmatprep.subr.bf16.mxu0 0
    %836 = vmatpush1.bf16.msra.mxu0 %v756
    %837 = vmatprep.mubr.bf16.mxu0 %v511
    %838 = vmatmul.mubr.bf16.gmra.mrb[0].mxu0 %v510
    %v839 = vpop.f32.mrb[0].mxu0
    %v840 = vadd.f32 %v611, %v839
    %v841 = vpop.f32.mrb[0].mxu0
    %v842 = vpop.f32.mrb[0].mxu0
    %v843 = vadd.f32 %v611, %v842
    %v844 = vpop.f32.mrb[0].mxu0
    %845 = vmatprep.mubr.bf16.mxu0 %v515
    %846 = vmatmul.mubr.bf16.gmra.mrb[0].mxu0 %v514
    %v847 = vpop.f32.mrb[0].mxu0
    %v848 = vadd.f32 %v611, %v847
    %v849 = vpop.f32.mrb[0].mxu0
    %v850 = vpop.f32.mrb[0].mxu0
    %v851 = vadd.f32 %v611, %v850
    %v852 = vpop.f32.mrb[0].mxu0
    %853 = vmatprep.mubr.bf16.mxu0 %v519
    %854 = vmatmul.mubr.bf16.gmra.mrb[0].mxu0 %v518
    %v855 = vpop.f32.mrb[0].mxu0
    %v856 = vadd.f32 %v611, %v855
    %v857 = vpop.f32.mrb[0].mxu0
    %v858 = vpop.f32.mrb[0].mxu0
    %v859 = vadd.f32 %v611, %v858
    %v860 = vpop.f32.mrb[0].mxu0
    %861 = vmatprep.mubr.bf16.mxu0 %v523
    %862 = vmatmul.mubr.bf16.gmra.mrb[0].mxu0 %v522
    %v863 = vpop.f32.mrb[0].mxu0
    %v864 = vadd.f32 %v611, %v863
    %v865 = vpop.f32.mrb[0].mxu0
    %v866 = vpop.f32.mrb[0].mxu0
    %v867 = vadd.f32 %v611, %v866
    %v868 = vpop.f32.mrb[0].mxu0
    %869 = vmatprep.mubr.bf16.mxu0 %v527
    %870 = vmatmul.mubr.bf16.gmra.mrb[0].mxu0 %v526
    %v871 = vpop.f32.mrb[0].mxu0
    %v872 = vadd.f32 %v611, %v871
    %v873 = vpop.f32.mrb[0].mxu0
    %v874 = vpop.f32.mrb[0].mxu0
    %v875 = vadd.f32 %v611, %v874
    %v876 = vpop.f32.mrb[0].mxu0
    %877 = vmatprep.mubr.bf16.mxu0 %v531
    %878 = vmatmul.mubr.bf16.gmra.mrb[0].mxu0 %v530
    %v879 = vpop.f32.mrb[0].mxu0
    %v880 = vadd.f32 %v611, %v879
    %v881 = vpop.f32.mrb[0].mxu0
    %v882 = vpop.f32.mrb[0].mxu0
    %v883 = vadd.f32 %v611, %v882
    %v884 = vpop.f32.mrb[0].mxu0
    %885 = vmatprep.mubr.bf16.mxu0 %v535
    %886 = vmatmul.mubr.bf16.gmra.mrb[0].mxu0 %v534
    %v887 = vpop.f32.mrb[0].mxu0
    %v888 = vadd.f32 %v611, %v887
    %v889 = vpop.f32.mrb[0].mxu0
    %v890 = vpop.f32.mrb[0].mxu0
    %v891 = vadd.f32 %v611, %v890
    %v892 = vpop.f32.mrb[0].mxu0
    %893 = vmatprep.mubr.bf16.mxu0 %v539
    %894 = vmatmul.mubr.bf16.gmra.mrb[0].mxu0 %v538
    %v895 = vpop.f32.mrb[0].mxu0
    %v896 = vadd.f32 %v611, %v895
    %v897 = vpop.f32.mrb[0].mxu0
    %v898 = vpop.f32.mrb[0].mxu0
    %v899 = vadd.f32 %v611, %v898
    %v900 = vpop.f32.mrb[0].mxu0
    %901 = vdwg.mxu0
    %902 = vmatprep.subr.bf16.mxu0 0
    %903 = vmatpush1.bf16.msra.mxu0 %v757
    %904 = vmatprep.subr.bf16.mxu0 0
    %905 = vmatpush1.bf16.msra.mxu0 %v758
    %906 = vmatprep.subr.bf16.mxu0 0
    %907 = vmatpush1.bf16.msra.mxu0 %v759
    %908 = vmatprep.subr.bf16.mxu0 0
    %909 = vmatpush1.bf16.msra.mxu0 %v760
    %910 = vmatprep.subr.bf16.mxu0 0
    %911 = vmatpush1.bf16.msra.mxu0 %v761
    %912 = vmatprep.subr.bf16.mxu0 0
    %913 = vmatpush1.bf16.msra.mxu0 %v762
    %914 = vmatprep.subr.bf16.mxu0 0
    %915 = vmatpush1.bf16.msra.mxu0 %v763
    %916 = vmatprep.subr.bf16.mxu0 0
    %917 = vmatpush1.bf16.msra.mxu0 %v764
    %918 = vmatprep.subr.bf16.mxu0 0
    %919 = vmatpush1.bf16.msra.mxu0 %v765
    %920 = vmatprep.subr.bf16.mxu0 0
    %921 = vmatpush1.bf16.msra.mxu0 %v766
    %922 = vmatprep.subr.bf16.mxu0 0
    %923 = vmatpush1.bf16.msra.mxu0 %v767
    %924 = vmatprep.subr.bf16.mxu0 0
    %925 = vmatpush1.bf16.msra.mxu0 %v768
    %926 = vmatprep.subr.bf16.mxu0 0
    %927 = vmatpush1.bf16.msra.mxu0 %v769
    %928 = vmatprep.subr.bf16.mxu0 0
    %929 = vmatpush1.bf16.msra.mxu0 %v770
    %930 = vmatprep.subr.bf16.mxu0 0
    %931 = vmatpush1.bf16.msra.mxu0 %v771
    %932 = vmatprep.subr.bf16.mxu0 0
    %933 = vmatpush1.bf16.msra.mxu0 %v772
    %934 = vmatprep.mubr.bf16.mxu0 %v513
    %935 = vmatmul.mubr.bf16.gmra.mrb[0].mxu0 %v512
    %v936 = vpop.f32.mrb[0].mxu0
    %v937 = vadd.f32 %v840, %v936
    %v938 = vpop.f32.mrb[0].mxu0
    %v939 = vpop.f32.mrb[0].mxu0
    %v940 = vadd.f32 %v843, %v939
    %v941 = vpop.f32.mrb[0].mxu0
    %942 = vmatprep.mubr.bf16.mxu0 %v517
    %943 = vmatmul.mubr.bf16.gmra.mrb[0].mxu0 %v516
    %v944 = vpop.f32.mrb[0].mxu0
    %v945 = vadd.f32 %v848, %v944
    %v946 = vpop.f32.mrb[0].mxu0
    %v947 = vpop.f32.mrb[0].mxu0
    %v948 = vadd.f32 %v851, %v947
    %v949 = vpop.f32.mrb[0].mxu0
    %950 = vmatprep.mubr.bf16.mxu0 %v521
    %951 = vmatmul.mubr.bf16.gmra.mrb[0].mxu0 %v520
    %v952 = vpop.f32.mrb[0].mxu0
    %v953 = vadd.f32 %v856, %v952
    %v954 = vpop.f32.mrb[0].mxu0
    %v955 = vpop.f32.mrb[0].mxu0
    %v956 = vadd.f32 %v859, %v955
    %v957 = vpop.f32.mrb[0].mxu0
    %958 = vmatprep.mubr.bf16.mxu0 %v525
    %959 = vmatmul.mubr.bf16.gmra.mrb[0].mxu0 %v524
    %v960 = vpop.f32.mrb[0].mxu0
    %v961 = vadd.f32 %v864, %v960
    %v962 = vpop.f32.mrb[0].mxu0
    %v963 = vpop.f32.mrb[0].mxu0
    %v964 = vadd.f32 %v867, %v963
    %v965 = vpop.f32.mrb[0].mxu0
    %966 = vmatprep.mubr.bf16.mxu0 %v529
    %967 = vmatmul.mubr.bf16.gmra.mrb[0].mxu0 %v528
    %v968 = vpop.f32.mrb[0].mxu0
    %v969 = vadd.f32 %v872, %v968
    %v970 = vpop.f32.mrb[0].mxu0
    %v971 = vpop.f32.mrb[0].mxu0
    %v972 = vadd.f32 %v875, %v971
    %v973 = vpop.f32.mrb[0].mxu0
    %974 = vmatprep.mubr.bf16.mxu0 %v533
    %975 = vmatmul.mubr.bf16.gmra.mrb[0].mxu0 %v532
    %v976 = vpop.f32.mrb[0].mxu0
    %v977 = vadd.f32 %v880, %v976
    %v978 = vpop.f32.mrb[0].mxu0
    %v979 = vpop.f32.mrb[0].mxu0
    %v980 = vadd.f32 %v883, %v979
    %v981 = vpop.f32.mrb[0].mxu0
    %982 = vmatprep.mubr.bf16.mxu0 %v537
    %983 = vmatmul.mubr.bf16.gmra.mrb[0].mxu0 %v536
    %v984 = vpop.f32.mrb[0].mxu0
    %v985 = vadd.f32 %v888, %v984
    %v986 = vpop.f32.mrb[0].mxu0
    %v987 = vpop.f32.mrb[0].mxu0
    %v988 = vadd.f32 %v891, %v987
    %v989 = vpop.f32.mrb[0].mxu0
    %990 = vmatprep.mubr.bf16.mxu0 %v541
    %991 = vmatmul.mubr.bf16.gmra.mrb[0].mxu0 %v540
    %v992 = vpop.f32.mrb[0].mxu0
    %v993 = vadd.f32 %v896, %v992
    %v994 = vpop.f32.mrb[0].mxu0
    %v995 = vpop.f32.mrb[0].mxu0
    %v996 = vadd.f32 %v899, %v995
    %v997 = vpop.f32.mrb[0].mxu0
    %998 = vdwg.mxu0
    %v999 = vmax.f32 %v937, 0.0
    %v1000 = vmax.f32 %v940, 0.0
    %v1001 = vmax.f32 %v945, 0.0
    %v1002 = vmax.f32 %v948, 0.0
    %v1003 = vmax.f32 %v953, 0.0
    %v1004 = vmax.f32 %v956, 0.0
    %v1005 = vmax.f32 %v961, 0.0
    %v1006 = vmax.f32 %v964, 0.0
    %v1007 = vmax.f32 %v969, 0.0
    %v1008 = vmax.f32 %v972, 0.0
    %v1009 = vmax.f32 %v977, 0.0
    %v1010 = vmax.f32 %v980, 0.0
    %v1011 = vmax.f32 %v985, 0.0
    %v1012 = vmax.f32 %v988, 0.0
    %v1013 = vmax.f32 %v993, 0.0
    %v1014 = vmax.f32 %v996, 0.0
    %v1015 = vld [vmem:[%s5] sm:$0x1]
    %v1017 = vlaneseq
    %v1018 = vshrl.u32 %v1017, 7
    %v1019 = vsub.s32 0, %v1018
    %v1020 = vrot.slane %v1015, %v1019
    %v1022 = vmul.f32 %v999, %v1020
    %v1023 = vmul.f32 %v1000, %v1020
    %v1024 = vmul.f32 %v1001, %v1020
    %v1025 = vmul.f32 %v1002, %v1020
    %v1026 = vmul.f32 %v1003, %v1020
    %v1027 = vmul.f32 %v1004, %v1020
    %v1028 = vmul.f32 %v1005, %v1020
    %v1029 = vmul.f32 %v1006, %v1020
    %v1030 = vmul.f32 %v1007, %v1020
    %v1031 = vmul.f32 %v1008, %v1020
    %v1032 = vmul.f32 %v1009, %v1020
    %v1033 = vmul.f32 %v1010, %v1020
    %v1034 = vmul.f32 %v1011, %v1020
    %v1035 = vmul.f32 %v1012, %v1020
    %v1036 = vmul.f32 %v1013, %v1020
    %v1037 = vmul.f32 %v1014, %v1020
    %1038 = vadd.xlane.f32.xlu0 %v1022
    %v1039 = vpop.xlane.xlu0 %1038
    %1040 = vadd.xlane.f32.xlu0 %v1023
    %v1041 = vpop.xlane.xlu0 %1040
    %1042 = vadd.xlane.f32.xlu0 %v1024
    %v1043 = vpop.xlane.xlu0 %1042
    %1044 = vadd.xlane.f32.xlu0 %v1025
    %v1045 = vpop.xlane.xlu0 %1044
    %1046 = vadd.xlane.f32.xlu0 %v1026
    %v1047 = vpop.xlane.xlu0 %1046
    %1048 = vadd.xlane.f32.xlu0 %v1027
    %v1049 = vpop.xlane.xlu0 %1048
    %1050 = vadd.xlane.f32.xlu0 %v1028
    %v1051 = vpop.xlane.xlu0 %1050
    %1052 = vadd.xlane.f32.xlu0 %v1029
    %v1053 = vpop.xlane.xlu0 %1052
    %1054 = vadd.xlane.f32.xlu0 %v1030
    %v1055 = vpop.xlane.xlu0 %1054
    %1056 = vadd.xlane.f32.xlu0 %v1031
    %v1057 = vpop.xlane.xlu0 %1056
    %1058 = vadd.xlane.f32.xlu0 %v1032
    %v1059 = vpop.xlane.xlu0 %1058
    %1060 = vadd.xlane.f32.xlu0 %v1033
    %v1061 = vpop.xlane.xlu0 %1060
    %1062 = vadd.xlane.f32.xlu0 %v1034
    %v1063 = vpop.xlane.xlu0 %1062
    %1064 = vadd.xlane.f32.xlu0 %v1035
    %v1065 = vpop.xlane.xlu0 %1064
    %1066 = vadd.xlane.f32.xlu0 %v1036
    %v1067 = vpop.xlane.xlu0 %1066
    %1068 = vadd.xlane.f32.xlu0 %v1037
    %v1069 = vpop.xlane.xlu0 %1068
    %s1070 = sld [smem:[#allocation2]]
    %v1071 = vstv %s1070
    %v1072 = vadd.f32 %v1039, %v1071
    %v1073 = vadd.f32 %v1041, %v1071
    %v1074 = vadd.f32 %v1043, %v1071
    %v1075 = vadd.f32 %v1045, %v1071
    %v1076 = vadd.f32 %v1047, %v1071
    %v1077 = vadd.f32 %v1049, %v1071
    %v1078 = vadd.f32 %v1051, %v1071
    %v1079 = vadd.f32 %v1053, %v1071
    %v1080 = vadd.f32 %v1055, %v1071
    %v1081 = vadd.f32 %v1057, %v1071
    %v1082 = vadd.f32 %v1059, %v1071
    %v1083 = vadd.f32 %v1061, %v1071
    %v1084 = vadd.f32 %v1063, %v1071
    %v1085 = vadd.f32 %v1065, %v1071
    %v1086 = vadd.f32 %v1067, %v1071
    %v1087 = vadd.f32 %v1069, %v1071
    %v1088 = vsub.f32 0.0, %v1072
    %v1089 = vsub.f32 0.0, %v1073
    %v1090 = vsub.f32 0.0, %v1074
    %v1091 = vsub.f32 0.0, %v1075
    %v1092 = vsub.f32 0.0, %v1076
    %v1093 = vsub.f32 0.0, %v1077
    %v1094 = vsub.f32 0.0, %v1078
    %v1095 = vsub.f32 0.0, %v1079
    %v1096 = vsub.f32 0.0, %v1080
    %v1097 = vsub.f32 0.0, %v1081
    %v1098 = vsub.f32 0.0, %v1082
    %v1099 = vsub.f32 0.0, %v1083
    %v1100 = vsub.f32 0.0, %v1084
    %v1101 = vsub.f32 0.0, %v1085
    %v1102 = vsub.f32 0.0, %v1086
    %v1103 = vsub.f32 0.0, %v1087
    %v1104 = vmul.f32 %v1088, 1.442695
    %v1105 = vpow.pop %v1104
    %v1106 = vmul.f32 %v1089, 1.442695
    %v1107 = vpow.pop %v1106
    %v1108 = vmul.f32 %v1090, 1.442695
    %v1109 = vpow.pop %v1108
    %v1110 = vmul.f32 %v1091, 1.442695
    %v1111 = vpow.pop %v1110
    %v1112 = vmul.f32 %v1092, 1.442695
    %v1113 = vpow.pop %v1112
    %v1114 = vmul.f32 %v1093, 1.442695
    %v1115 = vpow.pop %v1114
    %v1116 = vmul.f32 %v1094, 1.442695
    %v1117 = vpow.pop %v1116
    %v1118 = vmul.f32 %v1095, 1.442695
    %v1119 = vpow.pop %v1118
    %v1120 = vmul.f32 %v1096, 1.442695
    %v1121 = vpow.pop %v1120
    %v1122 = vmul.f32 %v1097, 1.442695
    %v1123 = vpow.pop %v1122
    %v1124 = vmul.f32 %v1098, 1.442695
    %v1125 = vpow.pop %v1124
    %v1126 = vmul.f32 %v1099, 1.442695
    %v1127 = vpow.pop %v1126
    %v1128 = vmul.f32 %v1100, 1.442695
    %v1129 = vpow.pop %v1128
    %v1130 = vmul.f32 %v1101, 1.442695
    %v1131 = vpow.pop %v1130
    %v1132 = vmul.f32 %v1102, 1.442695
    %v1133 = vpow.pop %v1132
    %v1134 = vmul.f32 %v1103, 1.442695
    %v1135 = vpow.pop %v1134
    %v1136 = vadd.f32 %v1105, 1.0
    %v1137 = vadd.f32 %v1107, 1.0
    %v1138 = vadd.f32 %v1109, 1.0
    %v1139 = vadd.f32 %v1111, 1.0
    %v1140 = vadd.f32 %v1113, 1.0
    %v1141 = vadd.f32 %v1115, 1.0
    %v1142 = vadd.f32 %v1117, 1.0
    %v1143 = vadd.f32 %v1119, 1.0
    %v1144 = vadd.f32 %v1121, 1.0
    %v1145 = vadd.f32 %v1123, 1.0
    %v1146 = vadd.f32 %v1125, 1.0
    %v1147 = vadd.f32 %v1127, 1.0
    %v1148 = vadd.f32 %v1129, 1.0
    %v1149 = vadd.f32 %v1131, 1.0
    %v1150 = vadd.f32 %v1133, 1.0
    %v1151 = vadd.f32 %v1135, 1.0
    %v1152 = vrcp.pop %v1136
    %v1153 = vrcp.pop %v1137
    %v1154 = vrcp.pop %v1138
    %v1155 = vrcp.pop %v1139
    %v1156 = vrcp.pop %v1140
    %v1157 = vrcp.pop %v1141
    %v1158 = vrcp.pop %v1142
    %v1159 = vrcp.pop %v1143
    %v1160 = vrcp.pop %v1144
    %v1161 = vrcp.pop %v1145
    %v1162 = vrcp.pop %v1146
    %v1163 = vrcp.pop %v1147
    %v1164 = vrcp.pop %v1148
    %v1165 = vrcp.pop %v1149
    %v1166 = vrcp.pop %v1150
    %v1167 = vrcp.pop %v1151
    %v1184 = vlaneseq
    %v1185 = vand.u32 %v1184, 127
    %v1186 = vlaneseq
    %v1187 = vshrl.u32 %v1186, 7
    %v1188 = vsub.s32 %v1185, %v1187
    %v1189 = vrot.slane %v1152, %v1188
    %v1190 = vadd.s32 %v1185, 4294967288
    %v1191 = vlaneseq
    %v1192 = vshrl.u32 %v1191, 7
    %v1193 = vsub.s32 %v1190, %v1192
    %v1194 = vrot.slane %v1153, %v1193
    %vm1195 = vcmask 130112
    %v1196 = vsel %vm1195, %v1194, %v1189
    %v1197 = vadd.s32 %v1185, 4294967280
    %v1198 = vlaneseq
    %v1199 = vshrl.u32 %v1198, 7
    %v1200 = vsub.s32 %v1197, %v1199
    %v1201 = vrot.slane %v1154, %v1200
    %vm1202 = vcmask 195712
    %v1203 = vsel %vm1202, %v1201, %v1196
    %v1204 = vadd.s32 %v1185, 4294967272
    %v1205 = vlaneseq
    %v1206 = vshrl.u32 %v1205, 7
    %v1207 = vsub.s32 %v1204, %v1206
    %v1208 = vrot.slane %v1155, %v1207
    %vm1209 = vcmask 261312
    %v1210 = vsel %vm1209, %v1208, %v1203
    %v1211 = vadd.s32 %v1185, 4294967264
    %v1212 = vlaneseq
    %v1213 = vshrl.u32 %v1212, 7
    %v1214 = vsub.s32 %v1211, %v1213
    %v1215 = vrot.slane %v1156, %v1214
    %vm1216 = vcmask 326912
    %v1217 = vsel %vm1216, %v1215, %v1210
    %v1218 = vadd.s32 %v1185, 4294967256
    %v1219 = vlaneseq
    %v1220 = vshrl.u32 %v1219, 7
    %v1221 = vsub.s32 %v1218, %v1220
    %v1222 = vrot.slane %v1157, %v1221
    %vm1223 = vcmask 392512
    %v1224 = vsel %vm1223, %v1222, %v1217
    %v1225 = vadd.s32 %v1185, 4294967248
    %v1226 = vlaneseq
    %v1227 = vshrl.u32 %v1226, 7
    %v1228 = vsub.s32 %v1225, %v1227
    %v1229 = vrot.slane %v1158, %v1228
    %vm1230 = vcmask 458112
    %v1231 = vsel %vm1230, %v1229, %v1224
    %v1232 = vadd.s32 %v1185, 4294967240
    %v1233 = vlaneseq
    %v1234 = vshrl.u32 %v1233, 7
    %v1235 = vsub.s32 %v1232, %v1234
    %v1236 = vrot.slane %v1159, %v1235
    %vm1237 = vcmask 523712
    %v1238 = vsel %vm1237, %v1236, %v1231
    %v1239 = vadd.s32 %v1185, 4294967232
    %v1240 = vlaneseq
    %v1241 = vshrl.u32 %v1240, 7
    %v1242 = vsub.s32 %v1239, %v1241
    %v1243 = vrot.slane %v1160, %v1242
    %vm1244 = vcmask 589312
    %v1245 = vsel %vm1244, %v1243, %v1238
    %v1246 = vadd.s32 %v1185, 4294967224
    %v1247 = vlaneseq
    %v1248 = vshrl.u32 %v1247, 7
    %v1249 = vsub.s32 %v1246, %v1248
    %v1250 = vrot.slane %v1161, %v1249
    %vm1251 = vcmask 654912
    %v1252 = vsel %vm1251, %v1250, %v1245
    %v1253 = vadd.s32 %v1185, 4294967216
    %v1254 = vlaneseq
    %v1255 = vshrl.u32 %v1254, 7
    %v1256 = vsub.s32 %v1253, %v1255
    %v1257 = vrot.slane %v1162, %v1256
    %vm1258 = vcmask 720512
    %v1259 = vsel %vm1258, %v1257, %v1252
    %v1260 = vadd.s32 %v1185, 4294967208
    %v1261 = vlaneseq
    %v1262 = vshrl.u32 %v1261, 7
    %v1263 = vsub.s32 %v1260, %v1262
    %v1264 = vrot.slane %v1163, %v1263
    %vm1265 = vcmask 786112
    %v1266 = vsel %vm1265, %v1264, %v1259
    %v1267 = vadd.s32 %v1185, 4294967200
    %v1268 = vlaneseq
    %v1269 = vshrl.u32 %v1268, 7
    %v1270 = vsub.s32 %v1267, %v1269
    %v1271 = vrot.slane %v1164, %v1270
    %vm1272 = vcmask 851712
    %v1273 = vsel %vm1272, %v1271, %v1266
    %v1274 = vadd.s32 %v1185, 4294967192
    %v1275 = vlaneseq
    %v1276 = vshrl.u32 %v1275, 7
    %v1277 = vsub.s32 %v1274, %v1276
    %v1278 = vrot.slane %v1165, %v1277
    %vm1279 = vcmask 917312
    %v1280 = vsel %vm1279, %v1278, %v1273
    %v1281 = vadd.s32 %v1185, 4294967184
    %v1282 = vlaneseq
    %v1283 = vshrl.u32 %v1282, 7
    %v1284 = vsub.s32 %v1281, %v1283
    %v1285 = vrot.slane %v1166, %v1284
    %vm1286 = vcmask 982912
    %v1287 = vsel %vm1286, %v1285, %v1280
    %v1288 = vadd.s32 %v1185, 4294967176
    %v1289 = vlaneseq
    %v1290 = vshrl.u32 %v1289, 7
    %v1291 = vsub.s32 %v1288, %v1290
    %v1292 = vrot.slane %v1167, %v1291
    %vm1293 = vcmask 1048512
    %v1294 = vsel %vm1293, %v1292, %v1287
    %1296 = vst [vmem:[%s7] sm:$0x1] %v1294
    // Predicated region
    $region42: #{_forward.1} parent=1 // pred_check
      _
    $region43: #{_forward.1} parent=1 // pred_check_branch
      %1298 = sbr.rel (0) target = $region45
    $region44: #{_forward.1} parent=1 // pred_region
      _
    $region45: #{_forward.1} parent=1 // pred_fallthru
      _
    // Predicated region
    $region46: #{_forward.1} parent=1 // pred_check
      _
    $region47: #{_forward.1} parent=1 // pred_check_branch
      %1300 = sbr.rel (0) target = $region49
    $region48: #{_forward.1} parent=1 // pred_region
      _
    $region49: #{_forward.1} parent=1 // pred_fallthru
      _
    %1301 = vsyncpa [#allocation4], 1
    %1302 = vsyncpa [#allocation6], 1

// kernel: _forward.1
$region0: #{_forward.1}
  #allocation0 [shape = 'u32[]', space=smem, size = 0x4, offset = 0x4, fixed_abs, tag = 'smem constant byte address 0x4 - core index']
  #allocation1 [shape = 'u32[144,128]{1,0:T(1,128)}', space=vmem, size = 0x12000, scoped, tag = 'internal scratch']
  #allocation2 [shape = 'f32[1]{0:T(128)S(6)}', space=smem, size = 0x200, scoped, tag = 'scoped memory for _forward.1']
  %s0 = inlined_call_operand.hbm [shape: f32[8,32], index: 0, kind: input, shape index: {}]
  %s1 = inlined_call_operand.hbm [shape: bf16[32,512], index: 1, kind: input, shape index: {}]
  %s2 = inlined_call_operand.vmem [shape: bf16[1,512], index: 2, kind: input, shape index: {}]
  %s3 = inlined_call_operand.hbm [shape: bf16[512,128], index: 3, kind: input, shape index: {}]
  %s4 = inlined_call_operand.vmem [shape: f32[1,128], index: 4, kind: input, shape index: {}]
  %s5 = inlined_call_operand.vmem [shape: f32[1,128], index: 5, kind: input, shape index: {}]
  %s6 = inlined_call_operand.<no memory space> [shape: f32[1], index: 6, kind: input, shape index: {}]
  %s7 = inlined_call_operand.vmem [shape: f32[1,128], index: 7, kind: output, shape index: {}]
  %s8 = sld [smem:[#allocation0]]
  $region50: #{_forward.1} parent=0
    _
  %s10 = ssub.s32 1, %s8
  %s11 = scalar_select 0, %s10, %s8
  %12 = sst [smem:[#allocation2]] %s6
  $region1: #{_forward.1} parent=0
    #allocation3 [shape = 'u8[65536]{0}', space=vmem, size = 0x10000, scoped, tag = 'input window, operand 0, single buffered']
    #allocation4 [shape = 's32[1]{0}', space=sflag, size = 0x4, scoped, tag = 'scoped memory for _forward.1']
    #allocation5 [shape = 'u8[32768]{0}', space=vmem, size = 0x8000, scoped, tag = 'input window, operand 1, single buffered']
    #allocation6 [shape = 's32[1]{0}', space=sflag, size = 0x4, scoped, tag = 'scoped memory for _forward.1']
    #allocation7 [shape = 'u8[131072]{0}', space=vmem, size = 0x20000, scoped, tag = 'input window, operand 3, single buffered']
    %13 = vsyncpa [#allocation4], 0
    %14 = vsyncpa [#allocation6], 0
    // Predicated region
    $region2: #{_forward.1} parent=1 // pred_check
      _
    $region3: #{_forward.1} parent=1 // pred_check_branch
      %16 = sbr.rel (0) target = $region5
    $region4: #{_forward.1} parent=1 // pred_region
      %s18 = ssub.s32 2048, 128
      %19 = vsyncadd [#allocation4], %s18
      %s20 = sshll.u32 [#allocation3], 4
      %s21 = int_to_ptr.vmem [resolvable:$true] %s20
      %26 = dma.hbm_to_vmem [thread:$0]  %s0, 128, %s21, [#allocation4], 128, 128, 8
    $region5: #{_forward.1} parent=1 // pred_fallthru
      _
    // Predicated region
    $region6: #{_forward.1} parent=1 // pred_check
      _
    $region7: #{_forward.1} parent=1 // pred_check_branch
      %28 = sbr.rel (0) target = $region9
    $region8: #{_forward.1} parent=1 // pred_region
      %s30 = ssub.s32 1024, 1024
      %31 = vsyncadd [#allocation6], %s30
      %s32 = sshll.u32 [#allocation5], 4
      %s33 = int_to_ptr.vmem [resolvable:$true] %s32
      %38 = dma.hbm_to_vmem [thread:$0]  %s1, 1024, %s33, [#allocation6], 256, 256, 16
    $region9: #{_forward.1} parent=1 // pred_fallthru
      _
    // Predicated region
    $region10: #{_forward.1} parent=1 // pred_check
      _
    $region11: #{_forward.1} parent=1 // pred_check_branch
      %40 = sbr.rel (0) target = $region13
    $region12: #{_forward.1} parent=1 // pred_region
      _
    $region13: #{_forward.1} parent=1 // pred_fallthru
      _
    // Predicated region
    $region14: #{_forward.1} parent=1 // pred_check
      _
    $region15: #{_forward.1} parent=1 // pred_check_branch
      %42 = sbr.rel (0) target = $region17
    $region16: #{_forward.1} parent=1 // pred_region
      %s44 = ssub.s32 4096, 4096
      %45 = vsyncadd [#allocation6], %s44
      %s46 = sshll.u32 [#allocation7], 4
      %s47 = int_to_ptr.vmem [resolvable:$true] %s46
      %52 = dma.hbm_to_vmem [thread:$0]  %s3, 4096, %s47, [#allocation6], 64, 64, 4
    $region17: #{_forward.1} parent=1 // pred_fallthru
      _
    // Predicated region
    $region18: #{_forward.1} parent=1 // pred_check
      _
    $region19: #{_forward.1} parent=1 // pred_check_branch
      %54 = sbr.rel (0) target = $region21
    $region20: #{_forward.1} parent=1 // pred_region
      _
    $region21: #{_forward.1} parent=1 // pred_fallthru
      _
    // Predicated region
    $region22: #{_forward.1} parent=1 // pred_check
      _
    $region23: #{_forward.1} parent=1 // pred_check_branch
      %56 = sbr.rel (0) target = $region25
    $region24: #{_forward.1} parent=1 // pred_region
      _
    $region25: #{_forward.1} parent=1 // pred_fallthru
      _
    // Predicated region
    $region26: #{_forward.1} parent=1 // pred_check
      _
    $region27: #{_forward.1} parent=1 // pred_check_branch
      %58 = sbr.rel (0) target = $region29
    $region28: #{_forward.1} parent=1 // pred_region
      _
    $region29: #{_forward.1} parent=1 // pred_fallthru
      _
    // Predicated region
    $region30: #{_forward.1} parent=1 // pred_check
      _
    $region31: #{_forward.1} parent=1 // pred_check_branch
      %60 = sbr.rel (0) target = $region33
    $region32: #{_forward.1} parent=1 // pred_region
      %61 = dma.done [#allocation4], 2048
    $region33: #{_forward.1} parent=1 // pred_fallthru
      _
    // Predicated region
    $region34: #{_forward.1} parent=1 // pred_check
      _
    $region35: #{_forward.1} parent=1 // pred_check_branch
      %63 = sbr.rel (0) target = $region37
    $region36: #{_forward.1} parent=1 // pred_region
      %64 = dma.done [#allocation6], 1024
    $region37: #{_forward.1} parent=1 // pred_fallthru
      _
    // Predicated region
    $region38: #{_forward.1} parent=1 // pred_check
      _
    $region39: #{_forward.1} parent=1 // pred_check_branch
      %66 = sbr.rel (0) target = $region41
    $region40: #{_forward.1} parent=1 // pred_region
      %67 = dma.done [#allocation6], 4096
    $region41: #{_forward.1} parent=1 // pred_fallthru
      _
    %v69 = vld [vmem:[#allocation3] sm:$0xff]
    %v70 = vld [vmem:[#allocation3 + $0x8] sm:$0xff]
    %v71 = vld [vmem:[#allocation3 + $0x10] sm:$0xff]
    %v72 = vld [vmem:[#allocation3 + $0x18] sm:$0xff]
    %v73 = vld [vmem:[#allocation3 + $0x20] sm:$0xff]
    %v74 = vld [vmem:[#allocation3 + $0x28] sm:$0xff]
    %v75 = vld [vmem:[#allocation3 + $0x30] sm:$0xff]
    %v76 = vld [vmem:[#allocation3 + $0x38] sm:$0xff]
    %v77 = vld [vmem:[#allocation3 + $0x40] sm:$0xff]
    %v78 = vld [vmem:[#allocation3 + $0x48] sm:$0xff]
    %v79 = vld [vmem:[#allocation3 + $0x50] sm:$0xff]
    %v80 = vld [vmem:[#allocation3 + $0x58] sm:$0xff]
    %v81 = vld [vmem:[#allocation3 + $0x60] sm:$0xff]
    %v82 = vld [vmem:[#allocation3 + $0x68] sm:$0xff]
    %v83 = vld [vmem:[#allocation3 + $0x70] sm:$0xff]
    %v84 = vld [vmem:[#allocation3 + $0x78] sm:$0xff]
    %v85 = vpack.c.bf16 %v70, %v69
    %v86 = vpack.c.bf16 %v72, %v71
    %v87 = vpack.c.bf16 %v74, %v73
    %v88 = vpack.c.bf16 %v76, %v75
    %v89 = vpack.c.bf16 %v78, %v77
    %v90 = vpack.c.bf16 %v80, %v79
    %v91 = vpack.c.bf16 %v82, %v81
    %v92 = vpack.c.bf16 %v84, %v83
    %v93 = vld [vmem:[#allocation5] sm:$0xff]
    %v94 = vld [vmem:[#allocation5 + $0x8] sm:$0xff]
    %v95 = vld [vmem:[#allocation5 + $0x10] sm:$0xff]
    %v96 = vld [vmem:[#allocation5 + $0x18] sm:$0xff]
    %v97 = vld [vmem:[#allocation5 + $0x20] sm:$0xff]
    %v98 = vld [vmem:[#allocation5 + $0x28] sm:$0xff]
    %v99 = vld [vmem:[#allocation5 + $0x30] sm:$0xff]
    %v100 = vld [vmem:[#allocation5 + $0x38] sm:$0xff]
    %v109 = vunpack.c.l.b16 %v93
    %v110 = vunpack.c.h.b16 %v93
    %v111 = vunpack.c.l.b16 %v94
    %v112 = vunpack.c.h.b16 %v94
    %v113 = vunpack.c.l.b16 %v95
    %v114 = vunpack.c.h.b16 %v95
    %v115 = vunpack.c.l.b16 %v96
    %v116 = vunpack.c.h.b16 %v96
    %v117 = vunpack.c.l.b16 %v97
    %v118 = vunpack.c.h.b16 %v97
    %v119 = vunpack.c.l.b16 %v98
    %v120 = vunpack.c.h.b16 %v98
    %v121 = vunpack.c.l.b16 %v99
    %v122 = vunpack.c.h.b16 %v99
    %v123 = vunpack.c.l.b16 %v100
    %v124 = vunpack.c.h.b16 %v100
    %v125 = vpack.c.b16 %v113, %v109
    %v126 = vpack.c.b16 %v114, %v110
    %v127 = vpack.c.b16 %v115, %v111
    %v128 = vpack.c.b16 %v116, %v112
    %v129 = vpack.c.b16 %v121, %v117
    %v130 = vpack.c.b16 %v122, %v118
    %v131 = vpack.c.b16 %v123, %v119
    %v132 = vpack.c.b16 %v124, %v120
    %vm141 = vcmask 261120
    %v143 = vsel %vm141, %v85, 0
    %v146 = vsel %vm141, %v86, 0
    %v149 = vsel %vm141, %v87, 0
    %v152 = vsel %vm141, %v88, 0
    %v155 = vsel %vm141, %v89, 0
    %v158 = vsel %vm141, %v90, 0
    %v161 = vsel %vm141, %v91, 0
    %v164 = vsel %vm141, %v92, 0
    %166 = vmatprep.subr.bf16.mxu0 %v126
    %167 = vmatpush1.bf16.msra.mxu0 %v125
    %168 = vmatprep.subr.bf16.mxu0 %v130
    %169 = vmatpush1.bf16.msra.mxu0 %v129
    %170 = vmatprep.subr.bf16.mxu0 0
    %171 = vmatpush1.bf16.msra.mxu0 0
    %172 = vmatprep.subr.bf16.mxu0 0
    %173 = vmatpush1.bf16.msra.mxu0 0
    %174 = vmatprep.subr.bf16.mxu0 0
    %175 = vmatpush1.bf16.msra.mxu0 0
    %176 = vmatprep.subr.bf16.mxu0 0
    %177 = vmatpush1.bf16.msra.mxu0 0
    %178 = vmatprep.subr.bf16.mxu0 0
    %179 = vmatpush1.bf16.msra.mxu0 0
    %180 = vmatprep.subr.bf16.mxu0 0
    %181 = vmatpush1.bf16.msra.mxu0 0
    %182 = vmatprep.subr.bf16.mxu0 0
    %183 = vmatpush1.bf16.msra.mxu0 0
    %184 = vmatprep.subr.bf16.mxu0 0
    %185 = vmatpush1.bf16.msra.mxu0 0
    %186 = vmatprep.subr.bf16.mxu0 0
    %187 = vmatpush1.bf16.msra.mxu0 0
    %188 = vmatprep.subr.bf16.mxu0 0
    %189 = vmatpush1.bf16.msra.mxu0 0
    %190 = vmatprep.subr.bf16.mxu0 0
    %191 = vmatpush1.bf16.msra.mxu0 0
    %192 = vmatprep.subr.bf16.mxu0 0
    %193 = vmatpush1.bf16.msra.mxu0 0
    %194 = vmatprep.subr.bf16.mxu0 0
    %195 = vmatpush1.bf16.msra.mxu0 0
    %196 = vmatprep.subr.bf16.mxu0 0
    %197 = vmatpush1.bf16.msra.mxu0 0
    %198 = vmatprep.mubr.bf16.mxu0 0
    %199 = vmatmul.mubr.bf16.gmra.mrb[0].mxu0 %v143
    %v200 = vpop.f32.mrb[0].mxu0
    %v201 = vadd.f32 0.0, %v200
    %v202 = vpop.f32.mrb[0].mxu0
    %v203 = vadd.f32 0.0, %v202
    %v204 = vpop.f32.mrb[0].mxu0
    %v205 = vadd.f32 0.0, %v204
    %v206 = vpop.f32.mrb[0].mxu0
    %v207 = vadd.f32 0.0, %v206
    %208 = vmatprep.mubr.bf16.mxu0 0
    %209 = vmatmul.mubr.bf16.gmra.mrb[0].mxu0 %v146
    %v210 = vpop.f32.mrb[0].mxu0
    %v211 = vadd.f32 0.0, %v210
    %v212 = vpop.f32.mrb[0].mxu0
    %v213 = vadd.f32 0.0, %v212
    %v214 = vpop.f32.mrb[0].mxu0
    %v215 = vadd.f32 0.0, %v214
    %v216 = vpop.f32.mrb[0].mxu0
    %v217 = vadd.f32 0.0, %v216
    %218 = vmatprep.mubr.bf16.mxu0 0
    %219 = vmatmul.mubr.bf16.gmra.mrb[0].mxu0 %v149
    %v220 = vpop.f32.mrb[0].mxu0
    %v221 = vadd.f32 0.0, %v220
    %v222 = vpop.f32.mrb[0].mxu0
    %v223 = vadd.f32 0.0, %v222
    %v224 = vpop.f32.mrb[0].mxu0
    %v225 = vadd.f32 0.0, %v224
    %v226 = vpop.f32.mrb[0].mxu0
    %v227 = vadd.f32 0.0, %v226
    %228 = vmatprep.mubr.bf16.mxu0 0
    %229 = vmatmul.mubr.bf16.gmra.mrb[0].mxu0 %v152
    %v230 = vpop.f32.mrb[0].mxu0
    %v231 = vadd.f32 0.0, %v230
    %v232 = vpop.f32.mrb[0].mxu0
    %v233 = vadd.f32 0.0, %v232
    %v234 = vpop.f32.mrb[0].mxu0
    %v235 = vadd.f32 0.0, %v234
    %v236 = vpop.f32.mrb[0].mxu0
    %v237 = vadd.f32 0.0, %v236
    %238 = vmatprep.mubr.bf16.mxu0 0
    %239 = vmatmul.mubr.bf16.gmra.mrb[0].mxu0 %v155
    %v240 = vpop.f32.mrb[0].mxu0
    %v241 = vadd.f32 0.0, %v240
    %v242 = vpop.f32.mrb[0].mxu0
    %v243 = vadd.f32 0.0, %v242
    %v244 = vpop.f32.mrb[0].mxu0
    %v245 = vadd.f32 0.0, %v244
    %v246 = vpop.f32.mrb[0].mxu0
    %v247 = vadd.f32 0.0, %v246
    %248 = vmatprep.mubr.bf16.mxu0 0
    %249 = vmatmul.mubr.bf16.gmra.mrb[0].mxu0 %v158
    %v250 = vpop.f32.mrb[0].mxu0
    %v251 = vadd.f32 0.0, %v250
    %v252 = vpop.f32.mrb[0].mxu0
    %v253 = vadd.f32 0.0, %v252
    %v254 = vpop.f32.mrb[0].mxu0
    %v255 = vadd.f32 0.0, %v254
    %v256 = vpop.f32.mrb[0].mxu0
    %v257 = vadd.f32 0.0, %v256
    %258 = vmatprep.mubr.bf16.mxu0 0
    %259 = vmatmul.mubr.bf16.gmra.mrb[0].mxu0 %v161
    %v260 = vpop.f32.mrb[0].mxu0
    %v261 = vadd.f32 0.0, %v260
    %v262 = vpop.f32.mrb[0].mxu0
    %v263 = vadd.f32 0.0, %v262
    %v264 = vpop.f32.mrb[0].mxu0
    %v265 = vadd.f32 0.0, %v264
    %v266 = vpop.f32.mrb[0].mxu0
    %v267 = vadd.f32 0.0, %v266
    %268 = vmatprep.mubr.bf16.mxu0 0
    %269 = vmatmul.mubr.bf16.gmra.mrb[0].mxu0 %v164
    %v270 = vpop.f32.mrb[0].mxu0
    %v271 = vadd.f32 0.0, %v270
    %v272 = vpop.f32.mrb[0].mxu0
    %v273 = vadd.f32 0.0, %v272
    %v274 = vpop.f32.mrb[0].mxu0
    %v275 = vadd.f32 0.0, %v274
    %v276 = vpop.f32.mrb[0].mxu0
    %v277 = vadd.f32 0.0, %v276
    %278 = vdwg.mxu0
    %279 = vmatprep.subr.bf16.mxu0 %v128
    %280 = vmatpush1.bf16.msra.mxu0 %v127
    %281 = vmatprep.subr.bf16.mxu0 %v132
    %282 = vmatpush1.bf16.msra.mxu0 %v131
    %283 = vmatprep.subr.bf16.mxu0 0
    %284 = vmatpush1.bf16.msra.mxu0 0
    %285 = vmatprep.subr.bf16.mxu0 0
    %286 = vmatpush1.bf16.msra.mxu0 0
    %287 = vmatprep.subr.bf16.mxu0 0
    %288 = vmatpush1.bf16.msra.mxu0 0
    %289 = vmatprep.subr.bf16.mxu0 0
    %290 = vmatpush1.bf16.msra.mxu0 0
    %291 = vmatprep.subr.bf16.mxu0 0
    %292 = vmatpush1.bf16.msra.mxu0 0
    %293 = vmatprep.subr.bf16.mxu0 0
    %294 = vmatpush1.bf16.msra.mxu0 0
    %295 = vmatprep.subr.bf16.mxu0 0
    %296 = vmatpush1.bf16.msra.mxu0 0
    %297 = vmatprep.subr.bf16.mxu0 0
    %298 = vmatpush1.bf16.msra.mxu0 0
    %299 = vmatprep.subr.bf16.mxu0 0
    %300 = vmatpush1.bf16.msra.mxu0 0
    %301 = vmatprep.subr.bf16.mxu0 0
    %302 = vmatpush1.bf16.msra.mxu0 0
    %303 = vmatprep.subr.bf16.mxu0 0
    %304 = vmatpush1.bf16.msra.mxu0 0
    %305 = vmatprep.subr.bf16.mxu0 0
    %306 = vmatpush1.bf16.msra.mxu0 0
    %307 = vmatprep.subr.bf16.mxu0 0
    %308 = vmatpush1.bf16.msra.mxu0 0
    %309 = vmatprep.subr.bf16.mxu0 0
    %310 = vmatpush1.bf16.msra.mxu0 0
    %311 = vmatprep.mubr.bf16.mxu0 0
    %312 = vmatmul.mubr.bf16.gmra.mrb[0].mxu0 %v143
    %v313 = vpop.f32.mrb[0].mxu0
    %v314 = vadd.f32 0.0, %v313
    %v315 = vpop.f32.mrb[0].mxu0
    %v316 = vadd.f32 0.0, %v315
    %v317 = vpop.f32.mrb[0].mxu0
    %v318 = vadd.f32 0.0, %v317
    %v319 = vpop.f32.mrb[0].mxu0
    %v320 = vadd.f32 0.0, %v319
    %321 = vmatprep.mubr.bf16.mxu0 0
    %322 = vmatmul.mubr.bf16.gmra.mrb[0].mxu0 %v146
    %v323 = vpop.f32.mrb[0].mxu0
    %v324 = vadd.f32 0.0, %v323
    %v325 = vpop.f32.mrb[0].mxu0
    %v326 = vadd.f32 0.0, %v325
    %v327 = vpop.f32.mrb[0].mxu0
    %v328 = vadd.f32 0.0, %v327
    %v329 = vpop.f32.mrb[0].mxu0
    %v330 = vadd.f32 0.0, %v329
    %331 = vmatprep.mubr.bf16.mxu0 0
    %332 = vmatmul.mubr.bf16.gmra.mrb[0].mxu0 %v149
    %v333 = vpop.f32.mrb[0].mxu0
    %v334 = vadd.f32 0.0, %v333
    %v335 = vpop.f32.mrb[0].mxu0
    %v336 = vadd.f32 0.0, %v335
    %v337 = vpop.f32.mrb[0].mxu0
    %v338 = vadd.f32 0.0, %v337
    %v339 = vpop.f32.mrb[0].mxu0
    %v340 = vadd.f32 0.0, %v339
    %341 = vmatprep.mubr.bf16.mxu0 0
    %342 = vmatmul.mubr.bf16.gmra.mrb[0].mxu0 %v152
    %v343 = vpop.f32.mrb[0].mxu0
    %v344 = vadd.f32 0.0, %v343
    %v345 = vpop.f32.mrb[0].mxu0
    %v346 = vadd.f32 0.0, %v345
    %v347 = vpop.f32.mrb[0].mxu0
    %v348 = vadd.f32 0.0, %v347
    %v349 = vpop.f32.mrb[0].mxu0
    %v350 = vadd.f32 0.0, %v349
    %351 = vmatprep.mubr.bf16.mxu0 0
    %352 = vmatmul.mubr.bf16.gmra.mrb[0].mxu0 %v155
    %v353 = vpop.f32.mrb[0].mxu0
    %v354 = vadd.f32 0.0, %v353
    %v355 = vpop.f32.mrb[0].mxu0
    %v356 = vadd.f32 0.0, %v355
    %v357 = vpop.f32.mrb[0].mxu0
    %v358 = vadd.f32 0.0, %v357
    %v359 = vpop.f32.mrb[0].mxu0
    %v360 = vadd.f32 0.0, %v359
    %361 = vmatprep.mubr.bf16.mxu0 0
    %362 = vmatmul.mubr.bf16.gmra.mrb[0].mxu0 %v158
    %v363 = vpop.f32.mrb[0].mxu0
    %v364 = vadd.f32 0.0, %v363
    %v365 = vpop.f32.mrb[0].mxu0
    %v366 = vadd.f32 0.0, %v365
    %v367 = vpop.f32.mrb[0].mxu0
    %v368 = vadd.f32 0.0, %v367
    %v369 = vpop.f32.mrb[0].mxu0
    %v370 = vadd.f32 0.0, %v369
    %371 = vmatprep.mubr.bf16.mxu0 0
    %372 = vmatmul.mubr.bf16.gmra.mrb[0].mxu0 %v161
    %v373 = vpop.f32.mrb[0].mxu0
    %v374 = vadd.f32 0.0, %v373
    %v375 = vpop.f32.mrb[0].mxu0
    %v376 = vadd.f32 0.0, %v375
    %v377 = vpop.f32.mrb[0].mxu0
    %v378 = vadd.f32 0.0, %v377
    %v379 = vpop.f32.mrb[0].mxu0
    %v380 = vadd.f32 0.0, %v379
    %381 = vmatprep.mubr.bf16.mxu0 0
    %382 = vmatmul.mubr.bf16.gmra.mrb[0].mxu0 %v164
    %v383 = vpop.f32.mrb[0].mxu0
    %v384 = vadd.f32 0.0, %v383
    %v385 = vpop.f32.mrb[0].mxu0
    %v386 = vadd.f32 0.0, %v385
    %v387 = vpop.f32.mrb[0].mxu0
    %v388 = vadd.f32 0.0, %v387
    %v389 = vpop.f32.mrb[0].mxu0
    %v390 = vadd.f32 0.0, %v389
    %391 = vdwg.mxu0
    %v392 = vpack.c.bf16 %v205, %v201
    %v393 = vpack.c.bf16 %v207, %v203
    %v394 = vpack.c.bf16 %v318, %v314
    %v395 = vpack.c.bf16 %v320, %v316
    %v396 = vpack.c.bf16 %v215, %v211
    %v397 = vpack.c.bf16 %v217, %v213
    %v398 = vpack.c.bf16 %v328, %v324
    %v399 = vpack.c.bf16 %v330, %v326
    %v400 = vpack.c.bf16 %v225, %v221
    %v401 = vpack.c.bf16 %v227, %v223
    %v402 = vpack.c.bf16 %v338, %v334
    %v403 = vpack.c.bf16 %v340, %v336
    %v404 = vpack.c.bf16 %v235, %v231
    %v405 = vpack.c.bf16 %v237, %v233
    %v406 = vpack.c.bf16 %v348, %v344
    %v407 = vpack.c.bf16 %v350, %v346
    %v408 = vpack.c.bf16 %v245, %v241
    %v409 = vpack.c.bf16 %v247, %v243
    %v410 = vpack.c.bf16 %v358, %v354
    %v411 = vpack.c.bf16 %v360, %v356
    %v412 = vpack.c.bf16 %v255, %v251
    %v413 = vpack.c.bf16 %v257, %v253
    %v414 = vpack.c.bf16 %v368, %v364
    %v415 = vpack.c.bf16 %v370, %v366
    %v416 = vpack.c.bf16 %v265, %v261
    %v417 = vpack.c.bf16 %v267, %v263
    %v418 = vpack.c.bf16 %v378, %v374
    %v419 = vpack.c.bf16 %v380, %v376
    %v420 = vpack.c.bf16 %v275, %v271
    %v421 = vpack.c.bf16 %v277, %v273
    %v422 = vpack.c.bf16 %v388, %v384
    %v423 = vpack.c.bf16 %v390, %v386
    %v424 = vld [vmem:[%s2] sm:$0xf]
    %v427 = vunpack.c.l.s4 1966171168
    %v428 = vunpack.c.0.s8 %v427
    %v429 = vlaneseq
    %v430 = vshrl.u32 %v429, 7
    %v431 = vsub.s32 %v428, %v430
    %v432 = vrot.slane %v424, %v431
    %v433 = vcombine.high %v432, %v432
    %v435 = vunpack.c.l.s4 1966171168
    %v436 = vunpack.c.0.s8 %v435
    %v437 = vlaneseq
    %v438 = vshrl.u32 %v437, 7
    %v439 = vsub.s32 %v436, %v438
    %v440 = vrot.slane %v432, %v439
    %v442 = vunpack.c.l.s4 1966171168
    %v443 = vunpack.c.0.s8 %v442
    %v444 = vlaneseq
    %v445 = vshrl.u32 %v444, 7
    %v446 = vsub.s32 %v443, %v445
    %v447 = vrot.slane %v433, %v446
    %v448 = vcombine.high %v440, %v440
    %v449 = vcombine.high %v447, %v447
    %v451 = vpack.i.b16 %v440, %v440
    %v453 = vlaneseq
    %v454 = vshrl.u32 %v453, 7
    %v455 = vsub.s32 0, %v454
    %v456 = vrot.slane %v451, %v455
    %v458 = vpack.i.b16 %v447, %v447
    %v460 = vlaneseq
    %v461 = vshrl.u32 %v460, 7
    %v462 = vsub.s32 0, %v461
    %v463 = vrot.slane %v458, %v462
    %v465 = vpack.i.b16 %v448, %v448
    %v467 = vlaneseq
    %v468 = vshrl.u32 %v467, 7
    %v469 = vsub.s32 0, %v468
    %v470 = vrot.slane %v465, %v469
    %v472 = vpack.i.b16 %v449, %v449
    %v474 = vlaneseq
    %v475 = vshrl.u32 %v474, 7
    %v476 = vsub.s32 0, %v475
    %v477 = vrot.slane %v472, %v476
    %v478 = vadd.bf16 %v392, %v456
    %v479 = vadd.bf16 %v393, %v463
    %v480 = vadd.bf16 %v394, %v470
    %v481 = vadd.bf16 %v395, %v477
    %v482 = vadd.bf16 %v396, %v456
    %v483 = vadd.bf16 %v397, %v463
    %v484 = vadd.bf16 %v398, %v470
    %v485 = vadd.bf16 %v399, %v477
    %v486 = vadd.bf16 %v400, %v456
    %v487 = vadd.bf16 %v401, %v463
    %v488 = vadd.bf16 %v402, %v470
    %v489 = vadd.bf16 %v403, %v477
    %v490 = vadd.bf16 %v404, %v456
    %v491 = vadd.bf16 %v405, %v463
    %v492 = vadd.bf16 %v406, %v470
    %v493 = vadd.bf16 %v407, %v477
    %v494 = vadd.bf16 %v408, %v456
    %v495 = vadd.bf16 %v409, %v463
    %v496 = vadd.bf16 %v410, %v470
    %v497 = vadd.bf16 %v411, %v477
    %v498 = vadd.bf16 %v412, %v456
    %v499 = vadd.bf16 %v413, %v463
    %v500 = vadd.bf16 %v414, %v470
    %v501 = vadd.bf16 %v415, %v477
    %v502 = vadd.bf16 %v416, %v456
    %v503 = vadd.bf16 %v417, %v463
    %v504 = vadd.bf16 %v418, %v470
    %v505 = vadd.bf16 %v419, %v477
    %v506 = vadd.bf16 %v420, %v456
    %v507 = vadd.bf16 %v421, %v463
    %v508 = vadd.bf16 %v422, %v470
    %v509 = vadd.bf16 %v423, %v477
    %v510 = vmax.bf16 %v478, 0
    %v511 = vmax.bf16 %v479, 0
    %v512 = vmax.bf16 %v480, 0
    %v513 = vmax.bf16 %v481, 0
    %v514 = vmax.bf16 %v482, 0
    %v515 = vmax.bf16 %v483, 0
    %v516 = vmax.bf16 %v484, 0
    %v517 = vmax.bf16 %v485, 0
    %v518 = vmax.bf16 %v486, 0
    %v519 = vmax.bf16 %v487, 0
    %v520 = vmax.bf16 %v488, 0
    %v521 = vmax.bf16 %v489, 0
    %v522 = vmax.bf16 %v490, 0
    %v523 = vmax.bf16 %v491, 0
    %v524 = vmax.bf16 %v492, 0
    %v525 = vmax.bf16 %v493, 0
    %v526 = vmax.bf16 %v494, 0
    %v527 = vmax.bf16 %v495, 0
    %v528 = vmax.bf16 %v496, 0
    %v529 = vmax.bf16 %v497, 0
    %v530 = vmax.bf16 %v498, 0
    %v531 = vmax.bf16 %v499, 0
    %v532 = vmax.bf16 %v500, 0
    %v533 = vmax.bf16 %v501, 0
    %v534 = vmax.bf16 %v502, 0
    %v535 = vmax.bf16 %v503, 0
    %v536 = vmax.bf16 %v504, 0
    %v537 = vmax.bf16 %v505, 0
    %v538 = vmax.bf16 %v506, 0
    %v539 = vmax.bf16 %v507, 0
    %v540 = vmax.bf16 %v508, 0
    %v541 = vmax.bf16 %v509, 0
    %v542 = vld [vmem:[#allocation7] sm:$0xf]
    %v543 = vld [vmem:[#allocation7 + $0x4] sm:$0xf]
    %v544 = vld [vmem:[#allocation7 + $0x8] sm:$0xf]
    %v545 = vld [vmem:[#allocation7 + $0xc] sm:$0xf]
    %v546 = vld [vmem:[#allocation7 + $0x10] sm:$0xf]
    %v547 = vld [vmem:[#allocation7 + $0x14] sm:$0xf]
    %v548 = vld [vmem:[#allocation7 + $0x18] sm:$0xf]
    %v549 = vld [vmem:[#allocation7 + $0x1c] sm:$0xf]
    %v550 = vld [vmem:[#allocation7 + $0x20] sm:$0xf]
    %v551 = vld [vmem:[#allocation7 + $0x24] sm:$0xf]
    %v552 = vld [vmem:[#allocation7 + $0x28] sm:$0xf]
    %v553 = vld [vmem:[#allocation7 + $0x2c] sm:$0xf]
    %v554 = vld [vmem:[#allocation7 + $0x30] sm:$0xf]
    %v555 = vld [vmem:[#allocation7 + $0x34] sm:$0xf]
    %v556 = vld [vmem:[#allocation7 + $0x38] sm:$0xf]
    %v557 = vld [vmem:[#allocation7 + $0x3c] sm:$0xf]
    %v558 = vld [vmem:[#allocation7 + $0x40] sm:$0xf]
    %v559 = vld [vmem:[#allocation7 + $0x44] sm:$0xf]
    %v560 = vld [vmem:[#allocation7 + $0x48] sm:$0xf]
    %v561 = vld [vmem:[#allocation7 + $0x4c] sm:$0xf]
    %v562 = vld [vmem:[#allocation7 + $0x50] sm:$0xf]
    %v563 = vld [vmem:[#allocation7 + $0x54] sm:$0xf]
    %v564 = vld [vmem:[#allocation7 + $0x58] sm:$0xf]
    %v565 = vld [vmem:[#allocation7 + $0x5c] sm:$0xf]
    %v566 = vld [vmem:[#allocation7 + $0x60] sm:$0xf]
    %v567 = vld [vmem:[#allocation7 + $0x64] sm:$0xf]
    %v568 = vld [vmem:[#allocation7 + $0x68] sm:$0xf]
    %v569 = vld [vmem:[#allocation7 + $0x6c] sm:$0xf]
    %v570 = vld [vmem:[#allocation7 + $0x70] sm:$0xf]
    %v571 = vld [vmem:[#allocation7 + $0x74] sm:$0xf]
    %v572 = vld [vmem:[#allocation7 + $0x78] sm:$0xf]
    %v573 = vld [vmem:[#allocation7 + $0x7c] sm:$0xf]
    %v574 = vld [vmem:[#allocation7 + $0x80] sm:$0xf]
    %v575 = vld [vmem:[#allocation7 + $0x84] sm:$0xf]
    %v576 = vld [vmem:[#allocation7 + $0x88] sm:$0xf]
    %v577 = vld [vmem:[#allocation7 + $0x8c] sm:$0xf]
    %v578 = vld [vmem:[#allocation7 + $0x90] sm:$0xf]
    %v579 = vld [vmem:[#allocation7 + $0x94] sm:$0xf]
    %v580 = vld [vmem:[#allocation7 + $0x98] sm:$0xf]
    %v581 = vld [vmem:[#allocation7 + $0x9c] sm:$0xf]
    %v582 = vld [vmem:[#allocation7 + $0xa0] sm:$0xf]
    %v583 = vld [vmem:[#allocation7 + $0xa4] sm:$0xf]
    %v584 = vld [vmem:[#allocation7 + $0xa8] sm:$0xf]
    %v585 = vld [vmem:[#allocation7 + $0xac] sm:$0xf]
    %v586 = vld [vmem:[#allocation7 + $0xb0] sm:$0xf]
    %v587 = vld [vmem:[#allocation7 + $0xb4] sm:$0xf]
    %v588 = vld [vmem:[#allocation7 + $0xb8] sm:$0xf]
    %v589 = vld [vmem:[#allocation7 + $0xbc] sm:$0xf]
    %v590 = vld [vmem:[#allocation7 + $0xc0] sm:$0xf]
    %v591 = vld [vmem:[#allocation7 + $0xc4] sm:$0xf]
    %v592 = vld [vmem:[#allocation7 + $0xc8] sm:$0xf]
    %v593 = vld [vmem:[#allocation7 + $0xcc] sm:$0xf]
    %v594 = vld [vmem:[#allocation7 + $0xd0] sm:$0xf]
    %v595 = vld [vmem:[#allocation7 + $0xd4] sm:$0xf]
    %v596 = vld [vmem:[#allocation7 + $0xd8] sm:$0xf]
    %v597 = vld [vmem:[#allocation7 + $0xdc] sm:$0xf]
    %v598 = vld [vmem:[#allocation7 + $0xe0] sm:$0xf]
    %v599 = vld [vmem:[#allocation7 + $0xe4] sm:$0xf]
    %v600 = vld [vmem:[#allocation7 + $0xe8] sm:$0xf]
    %v601 = vld [vmem:[#allocation7 + $0xec] sm:$0xf]
    %v602 = vld [vmem:[#allocation7 + $0xf0] sm:$0xf]
    %v603 = vld [vmem:[#allocation7 + $0xf4] sm:$0xf]
    %v604 = vld [vmem:[#allocation7 + $0xf8] sm:$0xf]
    %v605 = vld [vmem:[#allocation7 + $0xfc] sm:$0xf]
    %v606 = vld [vmem:[%s4] sm:$0x1]
    %v608 = vlaneseq
    %v609 = vshrl.u32 %v608, 7
    %v610 = vsub.s32 0, %v609
    %v611 = vrot.slane %v606, %v610
    %v677 = vunpack.c.l.b16 %v542
    %v678 = vunpack.c.l.b16 %v543
    %v679 = vunpack.c.l.b16 %v544
    %v680 = vunpack.c.l.b16 %v545
    %v681 = vunpack.c.l.b16 %v546
    %v682 = vunpack.c.l.b16 %v547
    %v683 = vunpack.c.l.b16 %v548
    %v684 = vunpack.c.l.b16 %v549
    %v685 = vunpack.c.l.b16 %v550
    %v686 = vunpack.c.l.b16 %v551
    %v687 = vunpack.c.l.b16 %v552
    %v688 = vunpack.c.l.b16 %v553
    %v689 = vunpack.c.l.b16 %v554
    %v690 = vunpack.c.l.b16 %v555
    %v691 = vunpack.c.l.b16 %v556
    %v692 = vunpack.c.l.b16 %v557
    %v693 = vunpack.c.l.b16 %v558
    %v694 = vunpack.c.l.b16 %v559
    %v695 = vunpack.c.l.b16 %v560
    %v696 = vunpack.c.l.b16 %v561
    %v697 = vunpack.c.l.b16 %v562
    %v698 = vunpack.c.l.b16 %v563
    %v699 = vunpack.c.l.b16 %v564
    %v700 = vunpack.c.l.b16 %v565
    %v701 = vunpack.c.l.b16 %v566
    %v702 = vunpack.c.l.b16 %v567
    %v703 = vunpack.c.l.b16 %v568
    %v704 = vunpack.c.l.b16 %v569
    %v705 = vunpack.c.l.b16 %v570
    %v706 = vunpack.c.l.b16 %v571
    %v707 = vunpack.c.l.b16 %v572
    %v708 = vunpack.c.l.b16 %v573
    %v709 = vunpack.c.l.b16 %v574
    %v710 = vunpack.c.l.b16 %v575
    %v711 = vunpack.c.l.b16 %v576
    %v712 = vunpack.c.l.b16 %v577
    %v713 = vunpack.c.l.b16 %v578
    %v714 = vunpack.c.l.b16 %v579
    %v715 = vunpack.c.l.b16 %v580
    %v716 = vunpack.c.l.b16 %v581
    %v717 = vunpack.c.l.b16 %v582
    %v718 = vunpack.c.l.b16 %v583
    %v719 = vunpack.c.l.b16 %v584
    %v720 = vunpack.c.l.b16 %v585
    %v721 = vunpack.c.l.b16 %v586
    %v722 = vunpack.c.l.b16 %v587
    %v723 = vunpack.c.l.b16 %v588
    %v724 = vunpack.c.l.b16 %v589
    %v725 = vunpack.c.l.b16 %v590
    %v726 = vunpack.c.l.b16 %v591
    %v727 = vunpack.c.l.b16 %v592
    %v728 = vunpack.c.l.b16 %v593
    %v729 = vunpack.c.l.b16 %v594
    %v730 = vunpack.c.l.b16 %v595
    %v731 = vunpack.c.l.b16 %v596
    %v732 = vunpack.c.l.b16 %v597
    %v733 = vunpack.c.l.b16 %v598
    %v734 = vunpack.c.l.b16 %v599
    %v735 = vunpack.c.l.b16 %v600
    %v736 = vunpack.c.l.b16 %v601
    %v737 = vunpack.c.l.b16 %v602
    %v738 = vunpack.c.l.b16 %v603
    %v739 = vunpack.c.l.b16 %v604
    %v740 = vunpack.c.l.b16 %v605
    %v741 = vpack.c.b16 %v678, %v677
    %v742 = vpack.c.b16 %v680, %v679
    %v743 = vpack.c.b16 %v682, %v681
    %v744 = vpack.c.b16 %v684, %v683
    %v745 = vpack.c.b16 %v686, %v685
    %v746 = vpack.c.b16 %v688, %v687
    %v747 = vpack.c.b16 %v690, %v689
    %v748 = vpack.c.b16 %v692, %v691
    %v749 = vpack.c.b16 %v694, %v693
    %v750 = vpack.c.b16 %v696, %v695
    %v751 = vpack.c.b16 %v698, %v697
    %v752 = vpack.c.b16 %v700, %v699
    %v753 = vpack.c.b16 %v702, %v701
    %v754 = vpack.c.b16 %v704, %v703
    %v755 = vpack.c.b16 %v706, %v705
    %v756 = vpack.c.b16 %v708, %v707
    %v757 = vpack.c.b16 %v710, %v709
    %v758 = vpack.c.b16 %v712, %v711
    %v759 = vpack.c.b16 %v714, %v713
    %v760 = vpack.c.b16 %v716, %v715
    %v761 = vpack.c.b16 %v718, %v717
    %v762 = vpack.c.b16 %v720, %v719
    %v763 = vpack.c.b16 %v722, %v721
    %v764 = vpack.c.b16 %v724, %v723
    %v765 = vpack.c.b16 %v726, %v725
    %v766 = vpack.c.b16 %v728, %v727
    %v767 = vpack.c.b16 %v730, %v729
    %v768 = vpack.c.b16 %v732, %v731
    %v769 = vpack.c.b16 %v734, %v733
    %v770 = vpack.c.b16 %v736, %v735
    %v771 = vpack.c.b16 %v738, %v737
    %v772 = vpack.c.b16 %v740, %v739
    %805 = vmatprep.subr.bf16.mxu0 0
    %806 = vmatpush1.bf16.msra.mxu0 %v741
    %807 = vmatprep.subr.bf16.mxu0 0
    %808 = vmatpush1.bf16.msra.mxu0 %v742
    %809 = vmatprep.subr.bf16.mxu0 0
    %810 = vmatpush1.bf16.msra.mxu0 %v743
    %811 = vmatprep.subr.bf16.mxu0 0
    %812 = vmatpush1.bf16.msra.mxu0 %v744
    %813 = vmatprep.subr.bf16.mxu0 0
    %814 = vmatpush1.bf16.msra.mxu0 %v745
    %815 = vmatprep.subr.bf16.mxu0 0
    %816 = vmatpush1.bf16.msra.mxu0 %v746
    %817 = vmatprep.subr.bf16.mxu0 0
    %818 = vmatpush1.bf16.msra.mxu0 %v747
    %819 = vmatprep.subr.bf16.mxu0 0
    %820 = vmatpush1.bf16.msra.mxu0 %v748
    %821 = vmatprep.subr.bf16.mxu0 0
    %822 = vmatpush1.bf16.msra.mxu0 %v749
    %823 = vmatprep.subr.bf16.mxu0 0
    %824 = vmatpush1.bf16.msra.mxu0 %v750
    %825 = vmatprep.subr.bf16.mxu0 0
    %826 = vmatpush1.bf16.msra.mxu0 %v751
    %827 = vmatprep.subr.bf16.mxu0 0
    %828 = vmatpush1.bf16.msra.mxu0 %v752
    %829 = vmatprep.subr.bf16.mxu0 0
    %830 = vmatpush1.bf16.msra.mxu0 %v753
    %831 = vmatprep.subr.bf16.mxu0 0
    %832 = vmatpush1.bf16.msra.mxu0 %v754
    %833 = vmatprep.subr.bf16.mxu0 0
    %834 = vmatpush1.bf16.msra.mxu0 %v755
    %835 = vmatprep.subr.bf16.mxu0 0
    %836 = vmatpush1.bf16.msra.mxu0 %v756
    %837 = vmatprep.mubr.bf16.mxu0 %v511
    %838 = vmatmul.mubr.bf16.gmra.mrb[0].mxu0 %v510
    %v839 = vpop.f32.mrb[0].mxu0
    %v840 = vadd.f32 %v611, %v839
    %v841 = vpop.f32.mrb[0].mxu0
    %v842 = vpop.f32.mrb[0].mxu0
    %v843 = vadd.f32 %v611, %v842
    %v844 = vpop.f32.mrb[0].mxu0
    %845 = vmatprep.mubr.bf16.mxu0 %v515
    %846 = vmatmul.mubr.bf16.gmra.mrb[0].mxu0 %v514
    %v847 = vpop.f32.mrb[0].mxu0
    %v848 = vadd.f32 %v611, %v847
    %v849 = vpop.f32.mrb[0].mxu0
    %v850 = vpop.f32.mrb[0].mxu0
    %v851 = vadd.f32 %v611, %v850
    %v852 = vpop.f32.mrb[0].mxu0
    %853 = vmatprep.mubr.bf16.mxu0 %v519
    %854 = vmatmul.mubr.bf16.gmra.mrb[0].mxu0 %v518
    %v855 = vpop.f32.mrb[0].mxu0
    %v856 = vadd.f32 %v611, %v855
    %v857 = vpop.f32.mrb[0].mxu0
    %v858 = vpop.f32.mrb[0].mxu0
    %v859 = vadd.f32 %v611, %v858
    %v860 = vpop.f32.mrb[0].mxu0
    %861 = vmatprep.mubr.bf16.mxu0 %v523
    %862 = vmatmul.mubr.bf16.gmra.mrb[0].mxu0 %v522
    %v863 = vpop.f32.mrb[0].mxu0
    %v864 = vadd.f32 %v611, %v863
    %v865 = vpop.f32.mrb[0].mxu0
    %v866 = vpop.f32.mrb[0].mxu0
    %v867 = vadd.f32 %v611, %v866
    %v868 = vpop.f32.mrb[0].mxu0
    %869 = vmatprep.mubr.bf16.mxu0 %v527
    %870 = vmatmul.mubr.bf16.gmra.mrb[0].mxu0 %v526
    %v871 = vpop.f32.mrb[0].mxu0
    %v872 = vadd.f32 %v611, %v871
    %v873 = vpop.f32.mrb[0].mxu0
    %v874 = vpop.f32.mrb[0].mxu0
    %v875 = vadd.f32 %v611, %v874
    %v876 = vpop.f32.mrb[0].mxu0
    %877 = vmatprep.mubr.bf16.mxu0 %v531
    %878 = vmatmul.mubr.bf16.gmra.mrb[0].mxu0 %v530
    %v879 = vpop.f32.mrb[0].mxu0
    %v880 = vadd.f32 %v611, %v879
    %v881 = vpop.f32.mrb[0].mxu0
    %v882 = vpop.f32.mrb[0].mxu0
    %v883 = vadd.f32 %v611, %v882
    %v884 = vpop.f32.mrb[0].mxu0
    %885 = vmatprep.mubr.bf16.mxu0 %v535
    %886 = vmatmul.mubr.bf16.gmra.mrb[0].mxu0 %v534
    %v887 = vpop.f32.mrb[0].mxu0
    %v888 = vadd.f32 %v611, %v887
    %v889 = vpop.f32.mrb[0].mxu0
    %v890 = vpop.f32.mrb[0].mxu0
    %v891 = vadd.f32 %v611, %v890
    %v892 = vpop.f32.mrb[0].mxu0
    %893 = vmatprep.mubr.bf16.mxu0 %v539
    %894 = vmatmul.mubr.bf16.gmra.mrb[0].mxu0 %v538
    %v895 = vpop.f32.mrb[0].mxu0
    %v896 = vadd.f32 %v611, %v895
    %v897 = vpop.f32.mrb[0].mxu0
    %v898 = vpop.f32.mrb[0].mxu0
    %v899 = vadd.f32 %v611, %v898
    %v900 = vpop.f32.mrb[0].mxu0
    %901 = vdwg.mxu0
    %902 = vmatprep.subr.bf16.mxu0 0
    %903 = vmatpush1.bf16.msra.mxu0 %v757
    %904 = vmatprep.subr.bf16.mxu0 0
    %905 = vmatpush1.bf16.msra.mxu0 %v758
    %906 = vmatprep.subr.bf16.mxu0 0
    %907 = vmatpush1.bf16.msra.mxu0 %v759
    %908 = vmatprep.subr.bf16.mxu0 0
    %909 = vmatpush1.bf16.msra.mxu0 %v760
    %910 = vmatprep.subr.bf16.mxu0 0
    %911 = vmatpush1.bf16.msra.mxu0 %v761
    %912 = vmatprep.subr.bf16.mxu0 0
    %913 = vmatpush1.bf16.msra.mxu0 %v762
    %914 = vmatprep.subr.bf16.mxu0 0
    %915 = vmatpush1.bf16.msra.mxu0 %v763
    %916 = vmatprep.subr.bf16.mxu0 0
    %917 = vmatpush1.bf16.msra.mxu0 %v764
    %918 = vmatprep.subr.bf16.mxu0 0
    %919 = vmatpush1.bf16.msra.mxu0 %v765
    %920 = vmatprep.subr.bf16.mxu0 0
    %921 = vmatpush1.bf16.msra.mxu0 %v766
    %922 = vmatprep.subr.bf16.mxu0 0
    %923 = vmatpush1.bf16.msra.mxu0 %v767
    %924 = vmatprep.subr.bf16.mxu0 0
    %925 = vmatpush1.bf16.msra.mxu0 %v768
    %926 = vmatprep.subr.bf16.mxu0 0
    %927 = vmatpush1.bf16.msra.mxu0 %v769
    %928 = vmatprep.subr.bf16.mxu0 0
    %929 = vmatpush1.bf16.msra.mxu0 %v770
    %930 = vmatprep.subr.bf16.mxu0 0
    %931 = vmatpush1.bf16.msra.mxu0 %v771
    %932 = vmatprep.subr.bf16.mxu0 0
    %933 = vmatpush1.bf16.msra.mxu0 %v772
    %934 = vmatprep.mubr.bf16.mxu0 %v513
    %935 = vmatmul.mubr.bf16.gmra.mrb[0].mxu0 %v512
    %v936 = vpop.f32.mrb[0].mxu0
    %v937 = vadd.f32 %v840, %v936
    %v938 = vpop.f32.mrb[0].mxu0
    %v939 = vpop.f32.mrb[0].mxu0
    %v940 = vadd.f32 %v843, %v939
    %v941 = vpop.f32.mrb[0].mxu0
    %942 = vmatprep.mubr.bf16.mxu0 %v517
    %943 = vmatmul.mubr.bf16.gmra.mrb[0].mxu0 %v516
    %v944 = vpop.f32.mrb[0].mxu0
    %v945 = vadd.f32 %v848, %v944
    %v946 = vpop.f32.mrb[0].mxu0
    %v947 = vpop.f32.mrb[0].mxu0
    %v948 = vadd.f32 %v851, %v947
    %v949 = vpop.f32.mrb[0].mxu0
    %950 = vmatprep.mubr.bf16.mxu0 %v521
    %951 = vmatmul.mubr.bf16.gmra.mrb[0].mxu0 %v520
    %v952 = vpop.f32.mrb[0].mxu0
    %v953 = vadd.f32 %v856, %v952
    %v954 = vpop.f32.mrb[0].mxu0
    %v955 = vpop.f32.mrb[0].mxu0
    %v956 = vadd.f32 %v859, %v955
    %v957 = vpop.f32.mrb[0].mxu0
    %958 = vmatprep.mubr.bf16.mxu0 %v525
    %959 = vmatmul.mubr.bf16.gmra.mrb[0].mxu0 %v524
    %v960 = vpop.f32.mrb[0].mxu0
    %v961 = vadd.f32 %v864, %v960
    %v962 = vpop.f32.mrb[0].mxu0
    %v963 = vpop.f32.mrb[0].mxu0
    %v964 = vadd.f32 %v867, %v963
    %v965 = vpop.f32.mrb[0].mxu0
    %966 = vmatprep.mubr.bf16.mxu0 %v529
    %967 = vmatmul.mubr.bf16.gmra.mrb[0].mxu0 %v528
    %v968 = vpop.f32.mrb[0].mxu0
    %v969 = vadd.f32 %v872, %v968
    %v970 = vpop.f32.mrb[0].mxu0
    %v971 = vpop.f32.mrb[0].mxu0
    %v972 = vadd.f32 %v875, %v971
    %v973 = vpop.f32.mrb[0].mxu0
    %974 = vmatprep.mubr.bf16.mxu0 %v533
    %975 = vmatmul.mubr.bf16.gmra.mrb[0].mxu0 %v532
    %v976 = vpop.f32.mrb[0].mxu0
    %v977 = vadd.f32 %v880, %v976
    %v978 = vpop.f32.mrb[0].mxu0
    %v979 = vpop.f32.mrb[0].mxu0
    %v980 = vadd.f32 %v883, %v979
    %v981 = vpop.f32.mrb[0].mxu0
    %982 = vmatprep.mubr.bf16.mxu0 %v537
    %983 = vmatmul.mubr.bf16.gmra.mrb[0].mxu0 %v536
    %v984 = vpop.f32.mrb[0].mxu0
    %v985 = vadd.f32 %v888, %v984
    %v986 = vpop.f32.mrb[0].mxu0
    %v987 = vpop.f32.mrb[0].mxu0
    %v988 = vadd.f32 %v891, %v987
    %v989 = vpop.f32.mrb[0].mxu0
    %990 = vmatprep.mubr.bf16.mxu0 %v541
    %991 = vmatmul.mubr.bf16.gmra.mrb[0].mxu0 %v540
    %v992 = vpop.f32.mrb[0].mxu0
    %v993 = vadd.f32 %v896, %v992
    %v994 = vpop.f32.mrb[0].mxu0
    %v995 = vpop.f32.mrb[0].mxu0
    %v996 = vadd.f32 %v899, %v995
    %v997 = vpop.f32.mrb[0].mxu0
    %998 = vdwg.mxu0
    %v999 = vmax.f32 %v937, 0.0
    %v1000 = vmax.f32 %v940, 0.0
    %v1001 = vmax.f32 %v945, 0.0
    %v1002 = vmax.f32 %v948, 0.0
    %v1003 = vmax.f32 %v953, 0.0
    %v1004 = vmax.f32 %v956, 0.0
    %v1005 = vmax.f32 %v961, 0.0
    %v1006 = vmax.f32 %v964, 0.0
    %v1007 = vmax.f32 %v969, 0.0
    %v1008 = vmax.f32 %v972, 0.0
    %v1009 = vmax.f32 %v977, 0.0
    %v1010 = vmax.f32 %v980, 0.0
    %v1011 = vmax.f32 %v985, 0.0
    %v1012 = vmax.f32 %v988, 0.0
    %v1013 = vmax.f32 %v993, 0.0
    %v1014 = vmax.f32 %v996, 0.0
    %v1015 = vld [vmem:[%s5] sm:$0x1]
    %v1017 = vlaneseq
    %v1018 = vshrl.u32 %v1017, 7
    %v1019 = vsub.s32 0, %v1018
    %v1020 = vrot.slane %v1015, %v1019
    %v1022 = vmul.f32 %v999, %v1020
    %v1023 = vmul.f32 %v1000, %v1020
    %v1024 = vmul.f32 %v1001, %v1020
    %v1025 = vmul.f32 %v1002, %v1020
    %v1026 = vmul.f32 %v1003, %v1020
    %v1027 = vmul.f32 %v1004, %v1020
    %v1028 = vmul.f32 %v1005, %v1020
    %v1029 = vmul.f32 %v1006, %v1020
    %v1030 = vmul.f32 %v1007, %v1020
    %v1031 = vmul.f32 %v1008, %v1020
    %v1032 = vmul.f32 %v1009, %v1020
    %v1033 = vmul.f32 %v1010, %v1020
    %v1034 = vmul.f32 %v1011, %v1020
    %v1035 = vmul.f32 %v1012, %v1020
    %v1036 = vmul.f32 %v1013, %v1020
    %v1037 = vmul.f32 %v1014, %v1020
    %1038 = vadd.xlane.f32.xlu0 %v1022
    %v1039 = vpop.xlane.xlu0 %1038
    %1040 = vadd.xlane.f32.xlu0 %v1023
    %v1041 = vpop.xlane.xlu0 %1040
    %1042 = vadd.xlane.f32.xlu0 %v1024
    %v1043 = vpop.xlane.xlu0 %1042
    %1044 = vadd.xlane.f32.xlu0 %v1025
    %v1045 = vpop.xlane.xlu0 %1044
    %1046 = vadd.xlane.f32.xlu0 %v1026
    %v1047 = vpop.xlane.xlu0 %1046
    %1048 = vadd.xlane.f32.xlu0 %v1027
    %v1049 = vpop.xlane.xlu0 %1048
    %1050 = vadd.xlane.f32.xlu0 %v1028
    %v1051 = vpop.xlane.xlu0 %1050
    %1052 = vadd.xlane.f32.xlu0 %v1029
    %v1053 = vpop.xlane.xlu0 %1052
    %1054 = vadd.xlane.f32.xlu0 %v1030
    %v1055 = vpop.xlane.xlu0 %1054
    %1056 = vadd.xlane.f32.xlu0 %v1031
    %v1057 = vpop.xlane.xlu0 %1056
    %1058 = vadd.xlane.f32.xlu0 %v1032
    %v1059 = vpop.xlane.xlu0 %1058
    %1060 = vadd.xlane.f32.xlu0 %v1033
    %v1061 = vpop.xlane.xlu0 %1060
    %1062 = vadd.xlane.f32.xlu0 %v1034
    %v1063 = vpop.xlane.xlu0 %1062
    %1064 = vadd.xlane.f32.xlu0 %v1035
    %v1065 = vpop.xlane.xlu0 %1064
    %1066 = vadd.xlane.f32.xlu0 %v1036
    %v1067 = vpop.xlane.xlu0 %1066
    %1068 = vadd.xlane.f32.xlu0 %v1037
    %v1069 = vpop.xlane.xlu0 %1068
    %s1070 = sld [smem:[#allocation2]]
    %v1071 = vstv %s1070
    %v1072 = vadd.f32 %v1039, %v1071
    %v1073 = vadd.f32 %v1041, %v1071
    %v1074 = vadd.f32 %v1043, %v1071
    %v1075 = vadd.f32 %v1045, %v1071
    %v1076 = vadd.f32 %v1047, %v1071
    %v1077 = vadd.f32 %v1049, %v1071
    %v1078 = vadd.f32 %v1051, %v1071
    %v1079 = vadd.f32 %v1053, %v1071
    %v1080 = vadd.f32 %v1055, %v1071
    %v1081 = vadd.f32 %v1057, %v1071
    %v1082 = vadd.f32 %v1059, %v1071
    %v1083 = vadd.f32 %v1061, %v1071
    %v1084 = vadd.f32 %v1063, %v1071
    %v1085 = vadd.f32 %v1065, %v1071
    %v1086 = vadd.f32 %v1067, %v1071
    %v1087 = vadd.f32 %v1069, %v1071
    %v1088 = vsub.f32 0.0, %v1072
    %v1089 = vsub.f32 0.0, %v1073
    %v1090 = vsub.f32 0.0, %v1074
    %v1091 = vsub.f32 0.0, %v1075
    %v1092 = vsub.f32 0.0, %v1076
    %v1093 = vsub.f32 0.0, %v1077
    %v1094 = vsub.f32 0.0, %v1078
    %v1095 = vsub.f32 0.0, %v1079
    %v1096 = vsub.f32 0.0, %v1080
    %v1097 = vsub.f32 0.0, %v1081
    %v1098 = vsub.f32 0.0, %v1082
    %v1099 = vsub.f32 0.0, %v1083
    %v1100 = vsub.f32 0.0, %v1084
    %v1101 = vsub.f32 0.0, %v1085
    %v1102 = vsub.f32 0.0, %v1086
    %v1103 = vsub.f32 0.0, %v1087
    %v1104 = vmul.f32 %v1088, 1.442695
    %v1105 = vpow.pop %v1104
    %v1106 = vmul.f32 %v1089, 1.442695
    %v1107 = vpow.pop %v1106
    %v1108 = vmul.f32 %v1090, 1.442695
    %v1109 = vpow.pop %v1108
    %v1110 = vmul.f32 %v1091, 1.442695
    %v1111 = vpow.pop %v1110
    %v1112 = vmul.f32 %v1092, 1.442695
    %v1113 = vpow.pop %v1112
    %v1114 = vmul.f32 %v1093, 1.442695
    %v1115 = vpow.pop %v1114
    %v1116 = vmul.f32 %v1094, 1.442695
    %v1117 = vpow.pop %v1116
    %v1118 = vmul.f32 %v1095, 1.442695
    %v1119 = vpow.pop %v1118
    %v1120 = vmul.f32 %v1096, 1.442695
    %v1121 = vpow.pop %v1120
    %v1122 = vmul.f32 %v1097, 1.442695
    %v1123 = vpow.pop %v1122
    %v1124 = vmul.f32 %v1098, 1.442695
    %v1125 = vpow.pop %v1124
    %v1126 = vmul.f32 %v1099, 1.442695
    %v1127 = vpow.pop %v1126
    %v1128 = vmul.f32 %v1100, 1.442695
    %v1129 = vpow.pop %v1128
    %v1130 = vmul.f32 %v1101, 1.442695
    %v1131 = vpow.pop %v1130
    %v1132 = vmul.f32 %v1102, 1.442695
    %v1133 = vpow.pop %v1132
    %v1134 = vmul.f32 %v1103, 1.442695
    %v1135 = vpow.pop %v1134
    %v1136 = vadd.f32 %v1105, 1.0
    %v1137 = vadd.f32 %v1107, 1.0
    %v1138 = vadd.f32 %v1109, 1.0
    %v1139 = vadd.f32 %v1111, 1.0
    %v1140 = vadd.f32 %v1113, 1.0
    %v1141 = vadd.f32 %v1115, 1.0
    %v1142 = vadd.f32 %v1117, 1.0
    %v1143 = vadd.f32 %v1119, 1.0
    %v1144 = vadd.f32 %v1121, 1.0
    %v1145 = vadd.f32 %v1123, 1.0
    %v1146 = vadd.f32 %v1125, 1.0
    %v1147 = vadd.f32 %v1127, 1.0
    %v1148 = vadd.f32 %v1129, 1.0
    %v1149 = vadd.f32 %v1131, 1.0
    %v1150 = vadd.f32 %v1133, 1.0
    %v1151 = vadd.f32 %v1135, 1.0
    %v1152 = vrcp.pop %v1136
    %v1153 = vrcp.pop %v1137
    %v1154 = vrcp.pop %v1138
    %v1155 = vrcp.pop %v1139
    %v1156 = vrcp.pop %v1140
    %v1157 = vrcp.pop %v1141
    %v1158 = vrcp.pop %v1142
    %v1159 = vrcp.pop %v1143
    %v1160 = vrcp.pop %v1144
    %v1161 = vrcp.pop %v1145
    %v1162 = vrcp.pop %v1146
    %v1163 = vrcp.pop %v1147
    %v1164 = vrcp.pop %v1148
    %v1165 = vrcp.pop %v1149
    %v1166 = vrcp.pop %v1150
    %v1167 = vrcp.pop %v1151
    %v1184 = vlaneseq
    %v1185 = vand.u32 %v1184, 127
    %v1186 = vlaneseq
    %v1187 = vshrl.u32 %v1186, 7
    %v1188 = vsub.s32 %v1185, %v1187
    %v1189 = vrot.slane %v1152, %v1188
    %v1190 = vadd.s32 %v1185, 4294967288
    %v1191 = vlaneseq
    %v1192 = vshrl.u32 %v1191, 7
    %v1193 = vsub.s32 %v1190, %v1192
    %v1194 = vrot.slane %v1153, %v1193
    %vm1195 = vcmask 130112
    %v1196 = vsel %vm1195, %v1194, %v1189
    %v1197 = vadd.s32 %v1185, 4294967280
    %v1198 = vlaneseq
    %v1199 = vshrl.u32 %v1198, 7
    %v1200 = vsub.s32 %v1197, %v1199
    %v1201 = vrot.slane %v1154, %v1200
    %vm1202 = vcmask 195712
    %v1203 = vsel %vm1202, %v1201, %v1196
    %v1204 = vadd.s32 %v1185, 4294967272
    %v1205 = vlaneseq
    %v1206 = vshrl.u32 %v1205, 7
    %v1207 = vsub.s32 %v1204, %v1206
    %v1208 = vrot.slane %v1155, %v1207
    %vm1209 = vcmask 261312
    %v1210 = vsel %vm1209, %v1208, %v1203
    %v1211 = vadd.s32 %v1185, 4294967264
    %v1212 = vlaneseq
    %v1213 = vshrl.u32 %v1212, 7
    %v1214 = vsub.s32 %v1211, %v1213
    %v1215 = vrot.slane %v1156, %v1214
    %vm1216 = vcmask 326912
    %v1217 = vsel %vm1216, %v1215, %v1210
    %v1218 = vadd.s32 %v1185, 4294967256
    %v1219 = vlaneseq
    %v1220 = vshrl.u32 %v1219, 7
    %v1221 = vsub.s32 %v1218, %v1220
    %v1222 = vrot.slane %v1157, %v1221
    %vm1223 = vcmask 392512
    %v1224 = vsel %vm1223, %v1222, %v1217
    %v1225 = vadd.s32 %v1185, 4294967248
    %v1226 = vlaneseq
    %v1227 = vshrl.u32 %v1226, 7
    %v1228 = vsub.s32 %v1225, %v1227
    %v1229 = vrot.slane %v1158, %v1228
    %vm1230 = vcmask 458112
    %v1231 = vsel %vm1230, %v1229, %v1224
    %v1232 = vadd.s32 %v1185, 4294967240
    %v1233 = vlaneseq
    %v1234 = vshrl.u32 %v1233, 7
    %v1235 = vsub.s32 %v1232, %v1234
    %v1236 = vrot.slane %v1159, %v1235
    %vm1237 = vcmask 523712
    %v1238 = vsel %vm1237, %v1236, %v1231
    %v1239 = vadd.s32 %v1185, 4294967232
    %v1240 = vlaneseq
    %v1241 = vshrl.u32 %v1240, 7
    %v1242 = vsub.s32 %v1239, %v1241
    %v1243 = vrot.slane %v1160, %v1242
    %vm1244 = vcmask 589312
    %v1245 = vsel %vm1244, %v1243, %v1238
    %v1246 = vadd.s32 %v1185, 4294967224
    %v1247 = vlaneseq
    %v1248 = vshrl.u32 %v1247, 7
    %v1249 = vsub.s32 %v1246, %v1248
    %v1250 = vrot.slane %v1161, %v1249
    %vm1251 = vcmask 654912
    %v1252 = vsel %vm1251, %v1250, %v1245
    %v1253 = vadd.s32 %v1185, 4294967216
    %v1254 = vlaneseq
    %v1255 = vshrl.u32 %v1254, 7
    %v1256 = vsub.s32 %v1253, %v1255
    %v1257 = vrot.slane %v1162, %v1256
    %vm1258 = vcmask 720512
    %v1259 = vsel %vm1258, %v1257, %v1252
    %v1260 = vadd.s32 %v1185, 4294967208
    %v1261 = vlaneseq
    %v1262 = vshrl.u32 %v1261, 7
    %v1263 = vsub.s32 %v1260, %v1262
    %v1264 = vrot.slane %v1163, %v1263
    %vm1265 = vcmask 786112
    %v1266 = vsel %vm1265, %v1264, %v1259
    %v1267 = vadd.s32 %v1185, 4294967200
    %v1268 = vlaneseq
    %v1269 = vshrl.u32 %v1268, 7
    %v1270 = vsub.s32 %v1267, %v1269
    %v1271 = vrot.slane %v1164, %v1270
    %vm1272 = vcmask 851712
    %v1273 = vsel %vm1272, %v1271, %v1266
    %v1274 = vadd.s32 %v1185, 4294967192
    %v1275 = vlaneseq
    %v1276 = vshrl.u32 %v1275, 7
    %v1277 = vsub.s32 %v1274, %v1276
    %v1278 = vrot.slane %v1165, %v1277
    %vm1279 = vcmask 917312
    %v1280 = vsel %vm1279, %v1278, %v1273
    %v1281 = vadd.s32 %v1185, 4294967184
    %v1282 = vlaneseq
    %v1283 = vshrl.u32 %v1282, 7
    %v1284 = vsub.s32 %v1281, %v1283
    %v1285 = vrot.slane %v1166, %v1284
    %vm1286 = vcmask 982912
    %v1287 = vsel %vm1286, %v1285, %v1280
    %v1288 = vadd.s32 %v1185, 4294967176
    %v1289 = vlaneseq
    %v1290 = vshrl.u32 %v1289, 7
    %v1291 = vsub.s32 %v1288, %v1290
    %v1292 = vrot.slane %v1167, %v1291
    %vm1293 = vcmask 1048512
    %v1294 = vsel %vm1293, %v1292, %v1287
    %1296 = vst [vmem:[%s7] sm:$0x1] %v1294
    // Predicated region
    $region42: #{_forward.1} parent=1 // pred_check
      _
    $region43: #{_forward.1} parent=1 // pred_check_branch
      %1298 = sbr.rel (0) target = $region45
    $region44: #{_forward.1} parent=1 // pred_region
      _
    $region45: #{_forward.1} parent=1 // pred_fallthru
      _
    // Predicated region
    $region46: #{_forward.1} parent=1 // pred_check
      _
    $region47: #{_forward.1} parent=1 // pred_check_branch
      %1300 = sbr.rel (0) target = $region49
    $region48: #{_forward.1} parent=1 // pred_region
      _
    $region49: #{_forward.1} parent=1 // pred_fallthru
      _
    %1301 = vsyncpa [#allocation4], 1
    %1302 = vsyncpa [#allocation6], 1

</llo_original>
